<compile_context>
chip_gen: v7x
topology: tpu7x:2x2x1
jax: 0.10.0
libtpu: 0.0.40
codegen_flags: <defaults>
</compile_context>

<pallas_src>
import math
import functools

import jax
import jax.numpy as jnp
from jax.experimental import pallas as pl
from jax.experimental.pallas import tpu as pltpu


# Padded log-variance: exp(0.5 * _NEG_LOGVAR) underflows to exactly 0.0 (also after a
# bf16 storage round-trip), so padded weight/bias entries sample to 0 and never
# pollute the real output block.
_NEG_LOGVAR = -1e30


def _round_up(x, m):
    return ((x + m - 1) // m) * m


def _pad2(a, rows, cols, fill=0.0):
    r, c = a.shape
    return jnp.pad(a, ((0, rows - r), (0, cols - c)), constant_values=fill)


def init_vcl_params(key, input_size, hidden_size, output_size):
    """Deterministic init matching MFVILayer.__init__ (bias kept 2-D as (1, F_out))."""
    sizes = [(input_size, hidden_size),
             (hidden_size, hidden_size),
             (hidden_size, hidden_size),
             (hidden_size, output_size)]
    log_var_init = math.log(1e-6)
    params = []
    for fin, fout in sizes:
        key, k_w, k_b = jax.random.split(key, 3)
        params.append({
            "W_m": 0.001 * jax.random.normal(k_w, (fout, fin), dtype=jnp.float32),
            "W_v": jnp.full((fout, fin), log_var_init, dtype=jnp.float32),
            "b_m": 0.001 * jax.random.normal(k_b, (1, fout), dtype=jnp.float32),
            "b_v": jnp.full((1, fout), log_var_init, dtype=jnp.float32),
        })
    return params


def prepare_vcl_params(params, param_dtype=jnp.bfloat16):
    """Hoisted, once-per-update parameter prep (NOT in the per-forward hot path).

    Pads every feature dim to a multiple of 128 lanes, pre-transposes W_m/W_v to
    (f_in, f_out) for a canonical (M,K)x(K,N) MXU matmul, and casts to the streaming
    dtype (bf16 halves the dominant HBM parameter stream).
    """
    prepared = []
    for p in params:
        fo, fi = p["W_m"].shape
        fi_p = _round_up(max(fi, 128), 128)
        fo_p = _round_up(max(fo, 128), 128)
        prepared.append({
            "W_m_t": _pad2(p["W_m"].T, fi_p, fo_p, 0.0).astype(param_dtype),
            "W_v_t": _pad2(p["W_v"].T, fi_p, fo_p, _NEG_LOGVAR).astype(param_dtype),
            "b_m": _pad2(p["b_m"], 1, fo_p, 0.0).astype(param_dtype),
            "b_v": _pad2(p["b_v"], 1, fo_p, _NEG_LOGVAR).astype(param_dtype),
            "f_in": fi, "f_out": fo, "f_in_p": fi_p, "f_out_p": fo_p,
        })
    return prepared


def _vcl_fused_kernel(x_ref, *refs, n_layers):
    """Fused n_layers-deep MFVI MLP forward for one batch tile.

    All intermediate activations stay in VMEM/vregs; parameters are read from their
    resident VMEM blocks (constant index_map across batch tiles).
    """
    param_refs = refs[:-1]
    out_ref = refs[-1]

    h = x_ref[...].astype(jnp.float32)                        # (Bt, f_in_p)
    for i in range(n_layers):
        (wm_ref, wv_ref, bm_ref, bv_ref,
         ew_ref, eb_ref) = param_refs[6 * i: 6 * (i + 1)]
        if i > 0:
            h = jnp.maximum(h, 0.0)                           # ReLU between layers only

        # Reparameterization trick. Elementwise math widened to f32 (v5e has no bf16
        # VPU/EUP); on v6e/v7x this could stay bf16 to halve the EUP-bound portion.
        sigma_w = jnp.exp(0.5 * wv_ref[...].astype(jnp.float32))
        w = wm_ref[...].astype(jnp.float32) + sigma_w * ew_ref[...].astype(jnp.float32)
        sigma_b = jnp.exp(0.5 * bv_ref[...].astype(jnp.float32))
        b = bm_ref[...].astype(jnp.float32) + sigma_b * eb_ref[...].astype(jnp.float32)

        # bf16 operands on the MXU, f32 accumulation. W is already (f_in_p, f_out_p),
        # so this is a canonical (M,K)x(K,N) matmul with no in-kernel transpose.
        h = jnp.dot(h.astype(jnp.bfloat16), w.astype(jnp.bfloat16),
                    preferred_element_type=jnp.float32) + b   # (Bt, f_out_p)

    out_ref[...] = h.astype(out_ref.dtype)


def vcl_forward(prepared, x, key, *, batch_tile=128):
    """VCL.forward: one fused Pallas kernel over all MFVI layers.

    `prepared` must come from prepare_vcl_params (padded / transposed / bf16 params
    kept in HBM across calls).
    """
    n_layers = len(prepared)
    B, f_in = x.shape
    assert f_in == prepared[0]["f_in"], (f_in, prepared[0]["f_in"])
    f_out = prepared[-1]["f_out"]

    # Batch tiling: tile is a multiple of 8 sublanes; grid axis is "parallel" so it
    # can be sharded across TensorCores (v7x).  Weights are one shared sample for the
    # whole forward, so all batch tiles reuse the same resident weight blocks.
    bt = min(_round_up(max(B, 8), 8), batch_tile)
    bp = _round_up(max(B, bt), bt)
    fi0_p = prepared[0]["f_in_p"]
    fo_last_p = prepared[-1]["f_out_p"]

    xp = _pad2(x.astype(jnp.float32), bp, fi0_p)

    # One fresh epsilon per layer per forward (matches torch: a single reparameterized
    # sample of the whole network per call). Drawn at padded shape in bf16; padded
    # entries are killed by sigma == 0 from the _NEG_LOGVAR padding.
    # TODO(synk): replace with in-kernel pltpu.prng_seed/stateful_normal on pure-TPU
    # runs to remove this HBM stream entirely.
    eps = []
    for p in prepared:
        key, k_w, k_b = jax.random.split(key, 3)
        eps.append((
            jax.random.normal(k_w, (p["f_in_p"], p["f_out_p"]), dtype=jnp.bfloat16),
            jax.random.normal(k_b, (1, p["f_out_p"]), dtype=jnp.bfloat16),
        ))

    grid = (bp // bt,)

    in_specs = [pl.BlockSpec((bt, fi0_p), lambda i: (i, 0))]
    operands = [xp]
    for p, (ew, eb) in zip(prepared, eps):
        fi_p, fo_p = p["f_in_p"], p["f_out_p"]
        # Constant block index => params/eps stay resident in VMEM across batch tiles.
        in_specs += [
            pl.BlockSpec((fi_p, fo_p), lambda i: (0, 0)),   # W_m (f_in, f_out)
            pl.BlockSpec((fi_p, fo_p), lambda i: (0, 0)),   # W_v (f_in, f_out)
            pl.BlockSpec((1, fo_p), lambda i: (0, 0)),      # b_m
            pl.BlockSpec((1, fo_p), lambda i: (0, 0)),      # b_v
            pl.BlockSpec((fi_p, fo_p), lambda i: (0, 0)),   # eps_W
            pl.BlockSpec((1, fo_p), lambda i: (0, 0)),      # eps_b
        ]
        operands += [p["W_m_t"], p["W_v_t"], p["b_m"], p["b_v"], ew, eb]

    out_spec = pl.BlockSpec((bt, fo_last_p), lambda i: (i, 0))

    # Explicit VMEM budget (v5e scoped default is only 16 MiB): resident params/eps
    # plus double-buffered activation tiles, with headroom.  For hidden sizes where
    # this approaches physical VMEM (64 MiB on v7x), switch to fo-chunked streaming
    # of W_m/W_v via pltpu.emit_pipeline instead of whole-layer residency.
    param_bytes = sum(int(o.size) * o.dtype.itemsize for o in operands)
    widest = max(fi0_p, fo_last_p, max(p["f_out_p"] for p in prepared))
    act_bytes = 4 * bt * widest
    vmem_limit = int(min(max(2 * (param_bytes + 4 * act_bytes), 32 * 1024 * 1024),
                         96 * 1024 * 1024))

    out_p = pl.pallas_call(
        functools.partial(_vcl_fused_kernel, n_layers=n_layers),
        grid=grid,
        in_specs=in_specs,
        out_specs=out_spec,
        out_shape=jax.ShapeDtypeStruct((bp, fo_last_p), jnp.float32),
        compiler_params=pltpu.CompilerParams(
            dimension_semantics=("parallel",),
            vmem_limit_bytes=vmem_limit,
        ),
    )(*operands)

    return out_p[:B, :f_out]


if __name__ == "__main__":
    key = jax.random.PRNGKey(0)
    k_params, k_x, k_fwd = jax.random.split(key, 3)

    batch = 2
    input_size = 16
    hidden_size = 32
    output_size = 8

    params = init_vcl_params(k_params, input_size, hidden_size, output_size)
    prepared = prepare_vcl_params(params)           # hoisted out of the call path
    x = jax.random.normal(k_x, (batch, input_size), dtype=jnp.float32)

    out = vcl_forward(prepared, x, k_fwd)
    out = jax.block_until_ready(out)
    assert out.shape == (batch, output_size), out.shape
    assert bool(jnp.all(jnp.isfinite(out)))
    print("KERNEL_OK")
</pallas_src>

<mosaic_0001>
module attributes {stable_mosaic.version = 11 : i64} {
  func.func @_vcl_fused_kernel(%arg0: i32, %arg1: memref<8x128xf32, #tpu.memory_space<vmem>>, %arg2: memref<128x128xbf16, #tpu.memory_space<vmem>>, %arg3: memref<128x128xbf16, #tpu.memory_space<vmem>>, %arg4: memref<1x128xbf16, #tpu.memory_space<vmem>>, %arg5: memref<1x128xbf16, #tpu.memory_space<vmem>>, %arg6: memref<128x128xbf16, #tpu.memory_space<vmem>>, %arg7: memref<1x128xbf16, #tpu.memory_space<vmem>>, %arg8: memref<128x128xbf16, #tpu.memory_space<vmem>>, %arg9: memref<128x128xbf16, #tpu.memory_space<vmem>>, %arg10: memref<1x128xbf16, #tpu.memory_space<vmem>>, %arg11: memref<1x128xbf16, #tpu.memory_space<vmem>>, %arg12: memref<128x128xbf16, #tpu.memory_space<vmem>>, %arg13: memref<1x128xbf16, #tpu.memory_space<vmem>>, %arg14: memref<128x128xbf16, #tpu.memory_space<vmem>>, %arg15: memref<128x128xbf16, #tpu.memory_space<vmem>>, %arg16: memref<1x128xbf16, #tpu.memory_space<vmem>>, %arg17: memref<1x128xbf16, #tpu.memory_space<vmem>>, %arg18: memref<128x128xbf16, #tpu.memory_space<vmem>>, %arg19: memref<1x128xbf16, #tpu.memory_space<vmem>>, %arg20: memref<128x128xbf16, #tpu.memory_space<vmem>>, %arg21: memref<128x128xbf16, #tpu.memory_space<vmem>>, %arg22: memref<1x128xbf16, #tpu.memory_space<vmem>>, %arg23: memref<1x128xbf16, #tpu.memory_space<vmem>>, %arg24: memref<128x128xbf16, #tpu.memory_space<vmem>>, %arg25: memref<1x128xbf16, #tpu.memory_space<vmem>>, %arg26: memref<8x128xf32, #tpu.memory_space<vmem>>) attributes {dimension_semantics = [#tpu.dimension_semantics<parallel>], iteration_bounds = array<i64: 1>, scalar_prefetch = 0 : i64, scratch_operands = 0 : i64, tpu.core_type = #tpu.core_type<tc>, window_params = [{transform_indices = @transform_0, window_bounds = array<i64: 8, 128>}, {pipeline_mode = #tpu.pipeline_mode<synchronous>, transform_indices = @transform_1, window_bounds = array<i64: 128, 128>}, {pipeline_mode = #tpu.pipeline_mode<synchronous>, transform_indices = @transform_2, window_bounds = array<i64: 128, 128>}, {pipeline_mode = #tpu.pipeline_mode<synchronous>, transform_indices = @transform_3, window_bounds = array<i64: 1, 128>}, {pipeline_mode = #tpu.pipeline_mode<synchronous>, transform_indices = @transform_4, window_bounds = array<i64: 1, 128>}, {pipeline_mode = #tpu.pipeline_mode<synchronous>, transform_indices = @transform_5, window_bounds = array<i64: 128, 128>}, {pipeline_mode = #tpu.pipeline_mode<synchronous>, transform_indices = @transform_6, window_bounds = array<i64: 1, 128>}, {pipeline_mode = #tpu.pipeline_mode<synchronous>, transform_indices = @transform_7, window_bounds = array<i64: 128, 128>}, {pipeline_mode = #tpu.pipeline_mode<synchronous>, transform_indices = @transform_8, window_bounds = array<i64: 128, 128>}, {pipeline_mode = #tpu.pipeline_mode<synchronous>, transform_indices = @transform_9, window_bounds = array<i64: 1, 128>}, {pipeline_mode = #tpu.pipeline_mode<synchronous>, transform_indices = @transform_10, window_bounds = array<i64: 1, 128>}, {pipeline_mode = #tpu.pipeline_mode<synchronous>, transform_indices = @transform_11, window_bounds = array<i64: 128, 128>}, {pipeline_mode = #tpu.pipeline_mode<synchronous>, transform_indices = @transform_12, window_bounds = array<i64: 1, 128>}, {pipeline_mode = #tpu.pipeline_mode<synchronous>, transform_indices = @transform_13, window_bounds = array<i64: 128, 128>}, {pipeline_mode = #tpu.pipeline_mode<synchronous>, transform_indices = @transform_14, window_bounds = array<i64: 128, 128>}, {pipeline_mode = #tpu.pipeline_mode<synchronous>, transform_indices = @transform_15, window_bounds = array<i64: 1, 128>}, {pipeline_mode = #tpu.pipeline_mode<synchronous>, transform_indices = @transform_16, window_bounds = array<i64: 1, 128>}, {pipeline_mode = #tpu.pipeline_mode<synchronous>, transform_indices = @transform_17, window_bounds = array<i64: 128, 128>}, {pipeline_mode = #tpu.pipeline_mode<synchronous>, transform_indices = @transform_18, window_bounds = array<i64: 1, 128>}, {pipeline_mode = #tpu.pipeline_mode<synchronous>, transform_indices = @transform_19, window_bounds = array<i64: 128, 128>}, {pipeline_mode = #tpu.pipeline_mode<synchronous>, transform_indices = @transform_20, window_bounds = array<i64: 128, 128>}, {pipeline_mode = #tpu.pipeline_mode<synchronous>, transform_indices = @transform_21, window_bounds = array<i64: 1, 128>}, {pipeline_mode = #tpu.pipeline_mode<synchronous>, transform_indices = @transform_22, window_bounds = array<i64: 1, 128>}, {pipeline_mode = #tpu.pipeline_mode<synchronous>, transform_indices = @transform_23, window_bounds = array<i64: 128, 128>}, {pipeline_mode = #tpu.pipeline_mode<synchronous>, transform_indices = @transform_24, window_bounds = array<i64: 1, 128>}, {transform_indices = @transform_25, window_bounds = array<i64: 8, 128>}]} {
    %c0 = arith.constant 0 : index
    %c0_0 = arith.constant 0 : index
    %0 = vector.load %arg1[%c0, %c0_0] : memref<8x128xf32, #tpu.memory_space<vmem>>, vector<8x128xf32>
    %c0_1 = arith.constant 0 : index
    %c0_2 = arith.constant 0 : index
    %1 = vector.load %arg3[%c0_1, %c0_2] : memref<128x128xbf16, #tpu.memory_space<vmem>>, vector<128x128xbf16>
    %2 = arith.extf %1 : vector<128x128xbf16> to vector<128x128xf32>
    %cst = arith.constant 5.000000e-01 : f32
    %3 = vector.broadcast %cst : f32 to vector<128x128xf32>
    %4 = arith.mulf %3, %2 : vector<128x128xf32>
    %5 = math.exp %4 : vector<128x128xf32>
    %c0_3 = arith.constant 0 : index
    %c0_4 = arith.constant 0 : index
    %6 = vector.load %arg2[%c0_3, %c0_4] : memref<128x128xbf16, #tpu.memory_space<vmem>>, vector<128x128xbf16>
    %7 = arith.extf %6 : vector<128x128xbf16> to vector<128x128xf32>
    %c0_5 = arith.constant 0 : index
    %c0_6 = arith.constant 0 : index
    %8 = vector.load %arg6[%c0_5, %c0_6] : memref<128x128xbf16, #tpu.memory_space<vmem>>, vector<128x128xbf16>
    %9 = arith.extf %8 : vector<128x128xbf16> to vector<128x128xf32>
    %10 = arith.mulf %5, %9 : vector<128x128xf32>
    %11 = arith.addf %7, %10 : vector<128x128xf32>
    %c0_7 = arith.constant 0 : index
    %c0_8 = arith.constant 0 : index
    %12 = vector.load %arg5[%c0_7, %c0_8] : memref<1x128xbf16, #tpu.memory_space<vmem>>, vector<1x128xbf16>
    %13 = arith.extf %12 : vector<1x128xbf16> to vector<1x128xf32>
    %cst_9 = arith.constant 5.000000e-01 : f32
    %14 = vector.broadcast %cst_9 : f32 to vector<1x128xf32>
    %15 = arith.mulf %14, %13 : vector<1x128xf32>
    %16 = math.exp %15 : vector<1x128xf32>
    %c0_10 = arith.constant 0 : index
    %c0_11 = arith.constant 0 : index
    %17 = vector.load %arg4[%c0_10, %c0_11] : memref<1x128xbf16, #tpu.memory_space<vmem>>, vector<1x128xbf16>
    %18 = arith.extf %17 : vector<1x128xbf16> to vector<1x128xf32>
    %c0_12 = arith.constant 0 : index
    %c0_13 = arith.constant 0 : index
    %19 = vector.load %arg7[%c0_12, %c0_13] : memref<1x128xbf16, #tpu.memory_space<vmem>>, vector<1x128xbf16>
    %20 = arith.extf %19 : vector<1x128xbf16> to vector<1x128xf32>
    %21 = arith.mulf %16, %20 : vector<1x128xf32>
    %22 = arith.addf %18, %21 : vector<1x128xf32>
    %23 = arith.truncf %0 : vector<8x128xf32> to vector<8x128xbf16>
    %24 = arith.truncf %11 : vector<128x128xf32> to vector<128x128xbf16>
    %cst_14 = arith.constant dense<0.000000e+00> : vector<8x128xf32>
    %25 = tpu.matmul %23, %24, %cst_14 {dimension_numbers = #tpu.dot_dimension_numbers<[1], [0], [0], [1], [0, 0, 1, 1], [], []>} : vector<8x128xbf16>, vector<128x128xbf16>, vector<8x128xf32> -> vector<8x128xf32>
    %26 = vector.broadcast %22 : vector<1x128xf32> to vector<8x128xf32>
    %27 = arith.addf %25, %26 : vector<8x128xf32>
    %cst_15 = arith.constant 0.000000e+00 : f32
    %28 = vector.broadcast %cst_15 : f32 to vector<8x128xf32>
    %29 = arith.maximumf %27, %28 : vector<8x128xf32>
    %c0_16 = arith.constant 0 : index
    %c0_17 = arith.constant 0 : index
    %30 = vector.load %arg9[%c0_16, %c0_17] : memref<128x128xbf16, #tpu.memory_space<vmem>>, vector<128x128xbf16>
    %31 = arith.extf %30 : vector<128x128xbf16> to vector<128x128xf32>
    %cst_18 = arith.constant 5.000000e-01 : f32
    %32 = vector.broadcast %cst_18 : f32 to vector<128x128xf32>
    %33 = arith.mulf %32, %31 : vector<128x128xf32>
    %34 = math.exp %33 : vector<128x128xf32>
    %c0_19 = arith.constant 0 : index
    %c0_20 = arith.constant 0 : index
    %35 = vector.load %arg8[%c0_19, %c0_20] : memref<128x128xbf16, #tpu.memory_space<vmem>>, vector<128x128xbf16>
    %36 = arith.extf %35 : vector<128x128xbf16> to vector<128x128xf32>
    %c0_21 = arith.constant 0 : index
    %c0_22 = arith.constant 0 : index
    %37 = vector.load %arg12[%c0_21, %c0_22] : memref<128x128xbf16, #tpu.memory_space<vmem>>, vector<128x128xbf16>
    %38 = arith.extf %37 : vector<128x128xbf16> to vector<128x128xf32>
    %39 = arith.mulf %34, %38 : vector<128x128xf32>
    %40 = arith.addf %36, %39 : vector<128x128xf32>
    %c0_23 = arith.constant 0 : index
    %c0_24 = arith.constant 0 : index
    %41 = vector.load %arg11[%c0_23, %c0_24] : memref<1x128xbf16, #tpu.memory_space<vmem>>, vector<1x128xbf16>
    %42 = arith.extf %41 : vector<1x128xbf16> to vector<1x128xf32>
    %cst_25 = arith.constant 5.000000e-01 : f32
    %43 = vector.broadcast %cst_25 : f32 to vector<1x128xf32>
    %44 = arith.mulf %43, %42 : vector<1x128xf32>
    %45 = math.exp %44 : vector<1x128xf32>
    %c0_26 = arith.constant 0 : index
    %c0_27 = arith.constant 0 : index
    %46 = vector.load %arg10[%c0_26, %c0_27] : memref<1x128xbf16, #tpu.memory_space<vmem>>, vector<1x128xbf16>
    %47 = arith.extf %46 : vector<1x128xbf16> to vector<1x128xf32>
    %c0_28 = arith.constant 0 : index
    %c0_29 = arith.constant 0 : index
    %48 = vector.load %arg13[%c0_28, %c0_29] : memref<1x128xbf16, #tpu.memory_space<vmem>>, vector<1x128xbf16>
    %49 = arith.extf %48 : vector<1x128xbf16> to vector<1x128xf32>
    %50 = arith.mulf %45, %49 : vector<1x128xf32>
    %51 = arith.addf %47, %50 : vector<1x128xf32>
    %52 = arith.truncf %29 : vector<8x128xf32> to vector<8x128xbf16>
    %53 = arith.truncf %40 : vector<128x128xf32> to vector<128x128xbf16>
    %cst_30 = arith.constant dense<0.000000e+00> : vector<8x128xf32>
    %54 = tpu.matmul %52, %53, %cst_30 {dimension_numbers = #tpu.dot_dimension_numbers<[1], [0], [0], [1], [0, 0, 1, 1], [], []>} : vector<8x128xbf16>, vector<128x128xbf16>, vector<8x128xf32> -> vector<8x128xf32>
    %55 = vector.broadcast %51 : vector<1x128xf32> to vector<8x128xf32>
    %56 = arith.addf %54, %55 : vector<8x128xf32>
    %cst_31 = arith.constant 0.000000e+00 : f32
    %57 = vector.broadcast %cst_31 : f32 to vector<8x128xf32>
    %58 = arith.maximumf %56, %57 : vector<8x128xf32>
    %c0_32 = arith.constant 0 : index
    %c0_33 = arith.constant 0 : index
    %59 = vector.load %arg15[%c0_32, %c0_33] : memref<128x128xbf16, #tpu.memory_space<vmem>>, vector<128x128xbf16>
    %60 = arith.extf %59 : vector<128x128xbf16> to vector<128x128xf32>
    %cst_34 = arith.constant 5.000000e-01 : f32
    %61 = vector.broadcast %cst_34 : f32 to vector<128x128xf32>
    %62 = arith.mulf %61, %60 : vector<128x128xf32>
    %63 = math.exp %62 : vector<128x128xf32>
    %c0_35 = arith.constant 0 : index
    %c0_36 = arith.constant 0 : index
    %64 = vector.load %arg14[%c0_35, %c0_36] : memref<128x128xbf16, #tpu.memory_space<vmem>>, vector<128x128xbf16>
    %65 = arith.extf %64 : vector<128x128xbf16> to vector<128x128xf32>
    %c0_37 = arith.constant 0 : index
    %c0_38 = arith.constant 0 : index
    %66 = vector.load %arg18[%c0_37, %c0_38] : memref<128x128xbf16, #tpu.memory_space<vmem>>, vector<128x128xbf16>
    %67 = arith.extf %66 : vector<128x128xbf16> to vector<128x128xf32>
    %68 = arith.mulf %63, %67 : vector<128x128xf32>
    %69 = arith.addf %65, %68 : vector<128x128xf32>
    %c0_39 = arith.constant 0 : index
    %c0_40 = arith.constant 0 : index
    %70 = vector.load %arg17[%c0_39, %c0_40] : memref<1x128xbf16, #tpu.memory_space<vmem>>, vector<1x128xbf16>
    %71 = arith.extf %70 : vector<1x128xbf16> to vector<1x128xf32>
    %cst_41 = arith.constant 5.000000e-01 : f32
    %72 = vector.broadcast %cst_41 : f32 to vector<1x128xf32>
    %73 = arith.mulf %72, %71 : vector<1x128xf32>
    %74 = math.exp %73 : vector<1x128xf32>
    %c0_42 = arith.constant 0 : index
    %c0_43 = arith.constant 0 : index
    %75 = vector.load %arg16[%c0_42, %c0_43] : memref<1x128xbf16, #tpu.memory_space<vmem>>, vector<1x128xbf16>
    %76 = arith.extf %75 : vector<1x128xbf16> to vector<1x128xf32>
    %c0_44 = arith.constant 0 : index
    %c0_45 = arith.constant 0 : index
    %77 = vector.load %arg19[%c0_44, %c0_45] : memref<1x128xbf16, #tpu.memory_space<vmem>>, vector<1x128xbf16>
    %78 = arith.extf %77 : vector<1x128xbf16> to vector<1x128xf32>
    %79 = arith.mulf %74, %78 : vector<1x128xf32>
    %80 = arith.addf %76, %79 : vector<1x128xf32>
    %81 = arith.truncf %58 : vector<8x128xf32> to vector<8x128xbf16>
    %82 = arith.truncf %69 : vector<128x128xf32> to vector<128x128xbf16>
    %cst_46 = arith.constant dense<0.000000e+00> : vector<8x128xf32>
    %83 = tpu.matmul %81, %82, %cst_46 {dimension_numbers = #tpu.dot_dimension_numbers<[1], [0], [0], [1], [0, 0, 1, 1], [], []>} : vector<8x128xbf16>, vector<128x128xbf16>, vector<8x128xf32> -> vector<8x128xf32>
    %84 = vector.broadcast %80 : vector<1x128xf32> to vector<8x128xf32>
    %85 = arith.addf %83, %84 : vector<8x128xf32>
    %cst_47 = arith.constant 0.000000e+00 : f32
    %86 = vector.broadcast %cst_47 : f32 to vector<8x128xf32>
    %87 = arith.maximumf %85, %86 : vector<8x128xf32>
    %c0_48 = arith.constant 0 : index
    %c0_49 = arith.constant 0 : index
    %88 = vector.load %arg21[%c0_48, %c0_49] : memref<128x128xbf16, #tpu.memory_space<vmem>>, vector<128x128xbf16>
    %89 = arith.extf %88 : vector<128x128xbf16> to vector<128x128xf32>
    %cst_50 = arith.constant 5.000000e-01 : f32
    %90 = vector.broadcast %cst_50 : f32 to vector<128x128xf32>
    %91 = arith.mulf %90, %89 : vector<128x128xf32>
    %92 = math.exp %91 : vector<128x128xf32>
    %c0_51 = arith.constant 0 : index
    %c0_52 = arith.constant 0 : index
    %93 = vector.load %arg20[%c0_51, %c0_52] : memref<128x128xbf16, #tpu.memory_space<vmem>>, vector<128x128xbf16>
    %94 = arith.extf %93 : vector<128x128xbf16> to vector<128x128xf32>
    %c0_53 = arith.constant 0 : index
    %c0_54 = arith.constant 0 : index
    %95 = vector.load %arg24[%c0_53, %c0_54] : memref<128x128xbf16, #tpu.memory_space<vmem>>, vector<128x128xbf16>
    %96 = arith.extf %95 : vector<128x128xbf16> to vector<128x128xf32>
    %97 = arith.mulf %92, %96 : vector<128x128xf32>
    %98 = arith.addf %94, %97 : vector<128x128xf32>
    %c0_55 = arith.constant 0 : index
    %c0_56 = arith.constant 0 : index
    %99 = vector.load %arg23[%c0_55, %c0_56] : memref<1x128xbf16, #tpu.memory_space<vmem>>, vector<1x128xbf16>
    %100 = arith.extf %99 : vector<1x128xbf16> to vector<1x128xf32>
    %cst_57 = arith.constant 5.000000e-01 : f32
    %101 = vector.broadcast %cst_57 : f32 to vector<1x128xf32>
    %102 = arith.mulf %101, %100 : vector<1x128xf32>
    %103 = math.exp %102 : vector<1x128xf32>
    %c0_58 = arith.constant 0 : index
    %c0_59 = arith.constant 0 : index
    %104 = vector.load %arg22[%c0_58, %c0_59] : memref<1x128xbf16, #tpu.memory_space<vmem>>, vector<1x128xbf16>
    %105 = arith.extf %104 : vector<1x128xbf16> to vector<1x128xf32>
    %c0_60 = arith.constant 0 : index
    %c0_61 = arith.constant 0 : index
    %106 = vector.load %arg25[%c0_60, %c0_61] : memref<1x128xbf16, #tpu.memory_space<vmem>>, vector<1x128xbf16>
    %107 = arith.extf %106 : vector<1x128xbf16> to vector<1x128xf32>
    %108 = arith.mulf %103, %107 : vector<1x128xf32>
    %109 = arith.addf %105, %108 : vector<1x128xf32>
    %110 = arith.truncf %87 : vector<8x128xf32> to vector<8x128xbf16>
    %111 = arith.truncf %98 : vector<128x128xf32> to vector<128x128xbf16>
    %cst_62 = arith.constant dense<0.000000e+00> : vector<8x128xf32>
    %112 = tpu.matmul %110, %111, %cst_62 {dimension_numbers = #tpu.dot_dimension_numbers<[1], [0], [0], [1], [0, 0, 1, 1], [], []>} : vector<8x128xbf16>, vector<128x128xbf16>, vector<8x128xf32> -> vector<8x128xf32>
    %113 = vector.broadcast %109 : vector<1x128xf32> to vector<8x128xf32>
    %114 = arith.addf %112, %113 : vector<8x128xf32>
    %c0_63 = arith.constant 0 : index
    %c0_64 = arith.constant 0 : index
    %115 = vector.load %arg26[%c0_63, %c0_64] : memref<8x128xf32, #tpu.memory_space<vmem>>, vector<8x128xf32>
    tpu.vector_store %arg26[%c0_63, %c0_64], %114 {strides = array<i32>} : memref<8x128xf32, #tpu.memory_space<vmem>>, vector<8x128xf32>,
    return
  }
  func.func @transform_0(%arg0: i32) -> (i32, i32) {
    %c0_i32 = arith.constant 0 : i32
    %c0_i32_0 = arith.constant 0 : i32
    return %arg0, %c0_i32 : i32, i32
  }
  func.func @transform_1(%arg0: i32) -> (i32, i32) {
    %c0_i32 = arith.constant 0 : i32
    %c0_i32_0 = arith.constant 0 : i32
    %c0_i32_1 = arith.constant 0 : i32
    return %c0_i32, %c0_i32_0 : i32, i32
  }
  func.func @transform_2(%arg0: i32) -> (i32, i32) {
    %c0_i32 = arith.constant 0 : i32
    %c0_i32_0 = arith.constant 0 : i32
    %c0_i32_1 = arith.constant 0 : i32
    return %c0_i32, %c0_i32_0 : i32, i32
  }
  func.func @transform_3(%arg0: i32) -> (i32, i32) {
    %c0_i32 = arith.constant 0 : i32
    %c0_i32_0 = arith.constant 0 : i32
    %c0_i32_1 = arith.constant 0 : i32
    return %c0_i32, %c0_i32_0 : i32, i32
  }
  func.func @transform_4(%arg0: i32) -> (i32, i32) {
    %c0_i32 = arith.constant 0 : i32
    %c0_i32_0 = arith.constant 0 : i32
    %c0_i32_1 = arith.constant 0 : i32
    return %c0_i32, %c0_i32_0 : i32, i32
  }
  func.func @transform_5(%arg0: i32) -> (i32, i32) {
    %c0_i32 = arith.constant 0 : i32
    %c0_i32_0 = arith.constant 0 : i32
    %c0_i32_1 = arith.constant 0 : i32
    return %c0_i32, %c0_i32_0 : i32, i32
  }
  func.func @transform_6(%arg0: i32) -> (i32, i32) {
    %c0_i32 = arith.constant 0 : i32
    %c0_i32_0 = arith.constant 0 : i32
    %c0_i32_1 = arith.constant 0 : i32
    return %c0_i32, %c0_i32_0 : i32, i32
  }
  func.func @transform_7(%arg0: i32) -> (i32, i32) {
    %c0_i32 = arith.constant 0 : i32
    %c0_i32_0 = arith.constant 0 : i32
    %c0_i32_1 = arith.constant 0 : i32
    return %c0_i32, %c0_i32_0 : i32, i32
  }
  func.func @transform_8(%arg0: i32) -> (i32, i32) {
    %c0_i32 = arith.constant 0 : i32
    %c0_i32_0 = arith.constant 0 : i32
    %c0_i32_1 = arith.constant 0 : i32
    return %c0_i32, %c0_i32_0 : i32, i32
  }
  func.func @transform_9(%arg0: i32) -> (i32, i32) {
    %c0_i32 = arith.constant 0 : i32
    %c0_i32_0 = arith.constant 0 : i32
    %c0_i32_1 = arith.constant 0 : i32
    return %c0_i32, %c0_i32_0 : i32, i32
  }
  func.func @transform_10(%arg0: i32) -> (i32, i32) {
    %c0_i32 = arith.constant 0 : i32
    %c0_i32_0 = arith.constant 0 : i32
    %c0_i32_1 = arith.constant 0 : i32
    return %c0_i32, %c0_i32_0 : i32, i32
  }
  func.func @transform_11(%arg0: i32) -> (i32, i32) {
    %c0_i32 = arith.constant 0 : i32
    %c0_i32_0 = arith.constant 0 : i32
    %c0_i32_1 = arith.constant 0 : i32
    return %c0_i32, %c0_i32_0 : i32, i32
  }
  func.func @transform_12(%arg0: i32) -> (i32, i32) {
    %c0_i32 = arith.constant 0 : i32
    %c0_i32_0 = arith.constant 0 : i32
    %c0_i32_1 = arith.constant 0 : i32
    return %c0_i32, %c0_i32_0 : i32, i32
  }
  func.func @transform_13(%arg0: i32) -> (i32, i32) {
    %c0_i32 = arith.constant 0 : i32
    %c0_i32_0 = arith.constant 0 : i32
    %c0_i32_1 = arith.constant 0 : i32
    return %c0_i32, %c0_i32_0 : i32, i32
  }
  func.func @transform_14(%arg0: i32) -> (i32, i32) {
    %c0_i32 = arith.constant 0 : i32
    %c0_i32_0 = arith.constant 0 : i32
    %c0_i32_1 = arith.constant 0 : i32
    return %c0_i32, %c0_i32_0 : i32, i32
  }
  func.func @transform_15(%arg0: i32) -> (i32, i32) {
    %c0_i32 = arith.constant 0 : i32
    %c0_i32_0 = arith.constant 0 : i32
    %c0_i32_1 = arith.constant 0 : i32
    return %c0_i32, %c0_i32_0 : i32, i32
  }
  func.func @transform_16(%arg0: i32) -> (i32, i32) {
    %c0_i32 = arith.constant 0 : i32
    %c0_i32_0 = arith.constant 0 : i32
    %c0_i32_1 = arith.constant 0 : i32
    return %c0_i32, %c0_i32_0 : i32, i32
  }
  func.func @transform_17(%arg0: i32) -> (i32, i32) {
    %c0_i32 = arith.constant 0 : i32
    %c0_i32_0 = arith.constant 0 : i32
    %c0_i32_1 = arith.constant 0 : i32
    return %c0_i32, %c0_i32_0 : i32, i32
  }
  func.func @transform_18(%arg0: i32) -> (i32, i32) {
    %c0_i32 = arith.constant 0 : i32
    %c0_i32_0 = arith.constant 0 : i32
    %c0_i32_1 = arith.constant 0 : i32
    return %c0_i32, %c0_i32_0 : i32, i32
  }
  func.func @transform_19(%arg0: i32) -> (i32, i32) {
    %c0_i32 = arith.constant 0 : i32
    %c0_i32_0 = arith.constant 0 : i32
    %c0_i32_1 = arith.constant 0 : i32
    return %c0_i32, %c0_i32_0 : i32, i32
  }
  func.func @transform_20(%arg0: i32) -> (i32, i32) {
    %c0_i32 = arith.constant 0 : i32
    %c0_i32_0 = arith.constant 0 : i32
    %c0_i32_1 = arith.constant 0 : i32
    return %c0_i32, %c0_i32_0 : i32, i32
  }
  func.func @transform_21(%arg0: i32) -> (i32, i32) {
    %c0_i32 = arith.constant 0 : i32
    %c0_i32_0 = arith.constant 0 : i32
    %c0_i32_1 = arith.constant 0 : i32
    return %c0_i32, %c0_i32_0 : i32, i32
  }
  func.func @transform_22(%arg0: i32) -> (i32, i32) {
    %c0_i32 = arith.constant 0 : i32
    %c0_i32_0 = arith.constant 0 : i32
    %c0_i32_1 = arith.constant 0 : i32
    return %c0_i32, %c0_i32_0 : i32, i32
  }
  func.func @transform_23(%arg0: i32) -> (i32, i32) {
    %c0_i32 = arith.constant 0 : i32
    %c0_i32_0 = arith.constant 0 : i32
    %c0_i32_1 = arith.constant 0 : i32
    return %c0_i32, %c0_i32_0 : i32, i32
  }
  func.func @transform_24(%arg0: i32) -> (i32, i32) {
    %c0_i32 = arith.constant 0 : i32
    %c0_i32_0 = arith.constant 0 : i32
    %c0_i32_1 = arith.constant 0 : i32
    return %c0_i32, %c0_i32_0 : i32, i32
  }
  func.func @transform_25(%arg0: i32) -> (i32, i32) {
    %c0_i32 = arith.constant 0 : i32
    %c0_i32_0 = arith.constant 0 : i32
    return %arg0, %c0_i32 : i32, i32
  }
}

</mosaic_0001>

<llo_original>
// kernel: tpu_custom_call.1
$region0: #{tpu_custom_call.1}
  #allocation0 [shape = 'u32[]', space=smem, size = 0x4, offset = 0x4, fixed_abs, tag = 'smem constant byte address 0x4 - core index']
  #allocation1 [shape = 'u32[144,128]{1,0:T(1,128)}', space=vmem, size = 0x12000, scoped, tag = 'internal scratch']
  %s0 = inlined_call_operand.hbm [shape: f32[8,128], index: 0, kind: input, shape index: {}]
  %s1 = inlined_call_operand.hbm [shape: bf16[128,128], index: 1, kind: input, shape index: {}]
  %s2 = inlined_call_operand.hbm [shape: bf16[128,128], index: 2, kind: input, shape index: {}]
  %s3 = inlined_call_operand.hbm [shape: bf16[1,128], index: 3, kind: input, shape index: {}]
  %s4 = inlined_call_operand.hbm [shape: bf16[1,128], index: 4, kind: input, shape index: {}]
  %s5 = inlined_call_operand.hbm [shape: bf16[128,128], index: 5, kind: input, shape index: {}]
  %s6 = inlined_call_operand.hbm [shape: bf16[1,128], index: 6, kind: input, shape index: {}]
  %s7 = inlined_call_operand.hbm [shape: bf16[128,128], index: 7, kind: input, shape index: {}]
  %s8 = inlined_call_operand.hbm [shape: bf16[128,128], index: 8, kind: input, shape index: {}]
  %s9 = inlined_call_operand.hbm [shape: bf16[1,128], index: 9, kind: input, shape index: {}]
  %s10 = inlined_call_operand.hbm [shape: bf16[1,128], index: 10, kind: input, shape index: {}]
  %s11 = inlined_call_operand.hbm [shape: bf16[128,128], index: 11, kind: input, shape index: {}]
  %s12 = inlined_call_operand.hbm [shape: bf16[1,128], index: 12, kind: input, shape index: {}]
  %s13 = inlined_call_operand.hbm [shape: bf16[128,128], index: 13, kind: input, shape index: {}]
  %s14 = inlined_call_operand.hbm [shape: bf16[128,128], index: 14, kind: input, shape index: {}]
  %s15 = inlined_call_operand.hbm [shape: bf16[1,128], index: 15, kind: input, shape index: {}]
  %s16 = inlined_call_operand.hbm [shape: bf16[1,128], index: 16, kind: input, shape index: {}]
  %s17 = inlined_call_operand.vmem [shape: bf16[128,128], index: 17, kind: input, shape index: {}]
  %s18 = inlined_call_operand.vmem [shape: bf16[1,128], index: 18, kind: input, shape index: {}]
  %s19 = inlined_call_operand.hbm [shape: bf16[128,128], index: 19, kind: input, shape index: {}]
  %s20 = inlined_call_operand.hbm [shape: bf16[128,128], index: 20, kind: input, shape index: {}]
  %s21 = inlined_call_operand.vmem [shape: bf16[1,128], index: 21, kind: input, shape index: {}]
  %s22 = inlined_call_operand.vmem [shape: bf16[1,128], index: 22, kind: input, shape index: {}]
  %s23 = inlined_call_operand.hbm [shape: bf16[128,128], index: 23, kind: input, shape index: {}]
  %s24 = inlined_call_operand.vmem [shape: bf16[1,128], index: 24, kind: input, shape index: {}]
  %s25 = inlined_call_operand.hbm [shape: f32[8,128], index: 25, kind: output, shape index: {}]
  %s26 = sld [smem:[#allocation0]]
  $region190: #{tpu_custom_call.1} parent=0
    _
  %s28 = ssub.s32 1, %s26
  %s29 = scalar_select 0, %s28, %s26
  $region1: #{tpu_custom_call.1} parent=0
    #allocation2 [shape = 'u8[4096]{0}', space=vmem, size = 0x1000, scoped, tag = 'input window, operand 0, single buffered']
    #allocation3 [shape = 's32[1]{0}', space=sflag, size = 0x4, scoped, tag = 'scoped memory for tpu_custom_call.1']
    #allocation4 [shape = 's32[1]{0}', space=sflag, size = 0x4, scoped, tag = 'scoped memory for tpu_custom_call.1']
    #allocation5 [shape = 'u8[32768]{0}', space=vmem, size = 0x8000, scoped, tag = 'input window, operand 1, single buffered']
    #allocation6 [shape = 's32[1]{0}', space=sflag, size = 0x4, scoped, tag = 'scoped memory for tpu_custom_call.1']
    #allocation7 [shape = 'u8[32768]{0}', space=vmem, size = 0x8000, scoped, tag = 'input window, operand 2, single buffered']
    #allocation8 [shape = 'u8[512]{0}', space=vmem, size = 0x400, scoped, tag = 'input window, operand 3, single buffered']
    #allocation9 [shape = 's32[1]{0}', space=sflag, size = 0x4, scoped, tag = 'scoped memory for tpu_custom_call.1']
    #allocation10 [shape = 'u8[512]{0}', space=vmem, size = 0x400, scoped, tag = 'input window, operand 4, single buffered']
    #allocation11 [shape = 'u8[32768]{0}', space=vmem, size = 0x8000, scoped, tag = 'input window, operand 5, single buffered']
    #allocation12 [shape = 's32[1]{0}', space=sflag, size = 0x4, scoped, tag = 'scoped memory for tpu_custom_call.1']
    #allocation13 [shape = 'u8[512]{0}', space=vmem, size = 0x400, scoped, tag = 'input window, operand 6, single buffered']
    #allocation14 [shape = 'u8[32768]{0}', space=vmem, size = 0x8000, scoped, tag = 'input window, operand 7, single buffered']
    #allocation15 [shape = 's32[1]{0}', space=sflag, size = 0x4, scoped, tag = 'scoped memory for tpu_custom_call.1']
    #allocation16 [shape = 'u8[32768]{0}', space=vmem, size = 0x8000, scoped, tag = 'input window, operand 8, single buffered']
    #allocation17 [shape = 'u8[512]{0}', space=vmem, size = 0x400, scoped, tag = 'input window, operand 9, single buffered']
    #allocation18 [shape = 's32[1]{0}', space=sflag, size = 0x4, scoped, tag = 'scoped memory for tpu_custom_call.1']
    #allocation19 [shape = 'u8[512]{0}', space=vmem, size = 0x400, scoped, tag = 'input window, operand 10, single buffered']
    #allocation20 [shape = 'u8[32768]{0}', space=vmem, size = 0x8000, scoped, tag = 'input window, operand 11, single buffered']
    #allocation21 [shape = 's32[1]{0}', space=sflag, size = 0x4, scoped, tag = 'scoped memory for tpu_custom_call.1']
    #allocation22 [shape = 'u8[512]{0}', space=vmem, size = 0x400, scoped, tag = 'input window, operand 12, single buffered']
    #allocation23 [shape = 'u8[32768]{0}', space=vmem, size = 0x8000, scoped, tag = 'input window, operand 13, single buffered']
    #allocation24 [shape = 's32[1]{0}', space=sflag, size = 0x4, scoped, tag = 'scoped memory for tpu_custom_call.1']
    #allocation25 [shape = 'u8[32768]{0}', space=vmem, size = 0x8000, scoped, tag = 'input window, operand 14, single buffered']
    #allocation26 [shape = 'u8[512]{0}', space=vmem, size = 0x400, scoped, tag = 'input window, operand 15, single buffered']
    #allocation27 [shape = 's32[1]{0}', space=sflag, size = 0x4, scoped, tag = 'scoped memory for tpu_custom_call.1']
    #allocation28 [shape = 'u8[512]{0}', space=vmem, size = 0x400, scoped, tag = 'input window, operand 16, single buffered']
    #allocation29 [shape = 'u8[32768]{0}', space=vmem, size = 0x8000, scoped, tag = 'input window, operand 19, single buffered']
    #allocation30 [shape = 's32[1]{0}', space=sflag, size = 0x4, scoped, tag = 'scoped memory for tpu_custom_call.1']
    #allocation31 [shape = 'u8[32768]{0}', space=vmem, size = 0x8000, scoped, tag = 'input window, operand 20, single buffered']
    #allocation32 [shape = 'u8[32768]{0}', space=vmem, size = 0x8000, scoped, tag = 'input window, operand 23, single buffered']
    #allocation33 [shape = 's32[1]{0}', space=sflag, size = 0x4, scoped, tag = 'scoped memory for tpu_custom_call.1']
    #allocation34 [shape = 'u8[4096]{0}', space=vmem, size = 0x1000, scoped, tag = 'output window, operand 0, single buffered']
    %30 = vsyncpa [#allocation3], 0
    %31 = vsyncpa [#allocation6], 0
    %32 = vsyncpa [#allocation9], 0
    %33 = vsyncpa [#allocation12], 0
    %34 = vsyncpa [#allocation15], 0
    %35 = vsyncpa [#allocation18], 0
    %36 = vsyncpa [#allocation21], 0
    %37 = vsyncpa [#allocation24], 0
    %38 = vsyncpa [#allocation27], 0
    %39 = vsyncpa [#allocation30], 0
    %40 = vsyncpa [#allocation33], 0
    %41 = vsyncpa [#allocation4], 0
    // Predicated region
    $region2: #{tpu_custom_call.1} parent=1 // pred_check
      _
    $region3: #{tpu_custom_call.1} parent=1 // pred_check_branch
      %43 = sbr.rel (0) target = $region5
    $region4: #{tpu_custom_call.1} parent=1 // pred_region
      %s45 = ssub.s32 128, 128
      %46 = vsyncadd [#allocation3], %s45
      %s48 = sshll.u32 [#allocation2], 4
      %s49 = int_to_ptr.vmem [resolvable:$true] %s48
      %51 = dma.hbm_to_vmem [thread:$0]  %s0, 128, %s49, [#allocation3]
    $region5: #{tpu_custom_call.1} parent=1 // pred_fallthru
      _
    // Predicated region
    $region6: #{tpu_custom_call.1} parent=1 // pred_check
      _
    $region7: #{tpu_custom_call.1} parent=1 // pred_check_branch
      %53 = sbr.rel (0) target = $region9
    $region8: #{tpu_custom_call.1} parent=1 // pred_region
      %s55 = ssub.s32 1024, 1024
      %56 = vsyncadd [#allocation6], %s55
      %s57 = sshll.u32 [#allocation5], 4
      %s58 = int_to_ptr.vmem [resolvable:$true] %s57
      %63 = dma.hbm_to_vmem [thread:$0]  %s1, 1024, %s58, [#allocation6], 64, 64, 4
    $region9: #{tpu_custom_call.1} parent=1 // pred_fallthru
      _
    // Predicated region
    $region10: #{tpu_custom_call.1} parent=1 // pred_check
      _
    $region11: #{tpu_custom_call.1} parent=1 // pred_check_branch
      %65 = sbr.rel (0) target = $region13
    $region12: #{tpu_custom_call.1} parent=1 // pred_region
      %s67 = ssub.s32 1024, 1024
      %68 = vsyncadd [#allocation6], %s67
      %s69 = sshll.u32 [#allocation7], 4
      %s70 = int_to_ptr.vmem [resolvable:$true] %s69
      %75 = dma.hbm_to_vmem [thread:$0]  %s2, 1024, %s70, [#allocation6], 64, 64, 4
    $region13: #{tpu_custom_call.1} parent=1 // pred_fallthru
      _
    // Predicated region
    $region14: #{tpu_custom_call.1} parent=1 // pred_check
      _
    $region15: #{tpu_custom_call.1} parent=1 // pred_check_branch
      %77 = sbr.rel (0) target = $region17
    $region16: #{tpu_custom_call.1} parent=1 // pred_region
      %s79 = ssub.s32 16, 16
      %80 = vsyncadd [#allocation9], %s79
      %s82 = sshll.u32 [#allocation8], 4
      %s83 = int_to_ptr.vmem [resolvable:$true] %s82
      %85 = dma.hbm_to_vmem [thread:$0]  %s3, 16, %s83, [#allocation9]
    $region17: #{tpu_custom_call.1} parent=1 // pred_fallthru
      _
    // Predicated region
    $region18: #{tpu_custom_call.1} parent=1 // pred_check
      _
    $region19: #{tpu_custom_call.1} parent=1 // pred_check_branch
      %87 = sbr.rel (0) target = $region21
    $region20: #{tpu_custom_call.1} parent=1 // pred_region
      %s89 = ssub.s32 16, 16
      %90 = vsyncadd [#allocation9], %s89
      %s92 = sshll.u32 [#allocation10], 4
      %s93 = int_to_ptr.vmem [resolvable:$true] %s92
      %95 = dma.hbm_to_vmem [thread:$0]  %s4, 16, %s93, [#allocation9]
    $region21: #{tpu_custom_call.1} parent=1 // pred_fallthru
      _
    // Predicated region
    $region22: #{tpu_custom_call.1} parent=1 // pred_check
      _
    $region23: #{tpu_custom_call.1} parent=1 // pred_check_branch
      %97 = sbr.rel (0) target = $region25
    $region24: #{tpu_custom_call.1} parent=1 // pred_region
      %s99 = ssub.s32 1024, 1024
      %100 = vsyncadd [#allocation12], %s99
      %s101 = sshll.u32 [#allocation11], 4
      %s102 = int_to_ptr.vmem [resolvable:$true] %s101
      %107 = dma.hbm_to_vmem [thread:$0]  %s5, 1024, %s102, [#allocation12], 64, 64, 4
    $region25: #{tpu_custom_call.1} parent=1 // pred_fallthru
      _
    // Predicated region
    $region26: #{tpu_custom_call.1} parent=1 // pred_check
      _
    $region27: #{tpu_custom_call.1} parent=1 // pred_check_branch
      %109 = sbr.rel (0) target = $region29
    $region28: #{tpu_custom_call.1} parent=1 // pred_region
      %s111 = ssub.s32 16, 16
      %112 = vsyncadd [#allocation12], %s111
      %s114 = sshll.u32 [#allocation13], 4
      %s115 = int_to_ptr.vmem [resolvable:$true] %s114
      %117 = dma.hbm_to_vmem [thread:$0]  %s6, 16, %s115, [#allocation12]
    $region29: #{tpu_custom_call.1} parent=1 // pred_fallthru
      _
    // Predicated region
    $region30: #{tpu_custom_call.1} parent=1 // pred_check
      _
    $region31: #{tpu_custom_call.1} parent=1 // pred_check_branch
      %119 = sbr.rel (0) target = $region33
    $region32: #{tpu_custom_call.1} parent=1 // pred_region
      %s121 = ssub.s32 1024, 1024
      %122 = vsyncadd [#allocation15], %s121
      %s123 = sshll.u32 [#allocation14], 4
      %s124 = int_to_ptr.vmem [resolvable:$true] %s123
      %129 = dma.hbm_to_vmem [thread:$0]  %s7, 1024, %s124, [#allocation15], 64, 64, 4
    $region33: #{tpu_custom_call.1} parent=1 // pred_fallthru
      _
    // Predicated region
    $region34: #{tpu_custom_call.1} parent=1 // pred_check
      _
    $region35: #{tpu_custom_call.1} parent=1 // pred_check_branch
      %131 = sbr.rel (0) target = $region37
    $region36: #{tpu_custom_call.1} parent=1 // pred_region
      %s133 = ssub.s32 1024, 1024
      %134 = vsyncadd [#allocation15], %s133
      %s135 = sshll.u32 [#allocation16], 4
      %s136 = int_to_ptr.vmem [resolvable:$true] %s135
      %141 = dma.hbm_to_vmem [thread:$0]  %s8, 1024, %s136, [#allocation15], 64, 64, 4
    $region37: #{tpu_custom_call.1} parent=1 // pred_fallthru
      _
    // Predicated region
    $region38: #{tpu_custom_call.1} parent=1 // pred_check
      _
    $region39: #{tpu_custom_call.1} parent=1 // pred_check_branch
      %143 = sbr.rel (0) target = $region41
    $region40: #{tpu_custom_call.1} parent=1 // pred_region
      %s145 = ssub.s32 16, 16
      %146 = vsyncadd [#allocation18], %s145
      %s148 = sshll.u32 [#allocation17], 4
      %s149 = int_to_ptr.vmem [resolvable:$true] %s148
      %151 = dma.hbm_to_vmem [thread:$0]  %s9, 16, %s149, [#allocation18]
    $region41: #{tpu_custom_call.1} parent=1 // pred_fallthru
      _
    // Predicated region
    $region42: #{tpu_custom_call.1} parent=1 // pred_check
      _
    $region43: #{tpu_custom_call.1} parent=1 // pred_check_branch
      %153 = sbr.rel (0) target = $region45
    $region44: #{tpu_custom_call.1} parent=1 // pred_region
      %s155 = ssub.s32 16, 16
      %156 = vsyncadd [#allocation18], %s155
      %s158 = sshll.u32 [#allocation19], 4
      %s159 = int_to_ptr.vmem [resolvable:$true] %s158
      %161 = dma.hbm_to_vmem [thread:$0]  %s10, 16, %s159, [#allocation18]
    $region45: #{tpu_custom_call.1} parent=1 // pred_fallthru
      _
    // Predicated region
    $region46: #{tpu_custom_call.1} parent=1 // pred_check
      _
    $region47: #{tpu_custom_call.1} parent=1 // pred_check_branch
      %163 = sbr.rel (0) target = $region49
    $region48: #{tpu_custom_call.1} parent=1 // pred_region
      %s165 = ssub.s32 1024, 1024
      %166 = vsyncadd [#allocation21], %s165
      %s167 = sshll.u32 [#allocation20], 4
      %s168 = int_to_ptr.vmem [resolvable:$true] %s167
      %173 = dma.hbm_to_vmem [thread:$0]  %s11, 1024, %s168, [#allocation21], 64, 64, 4
    $region49: #{tpu_custom_call.1} parent=1 // pred_fallthru
      _
    // Predicated region
    $region50: #{tpu_custom_call.1} parent=1 // pred_check
      _
    $region51: #{tpu_custom_call.1} parent=1 // pred_check_branch
      %175 = sbr.rel (0) target = $region53
    $region52: #{tpu_custom_call.1} parent=1 // pred_region
      %s177 = ssub.s32 16, 16
      %178 = vsyncadd [#allocation21], %s177
      %s180 = sshll.u32 [#allocation22], 4
      %s181 = int_to_ptr.vmem [resolvable:$true] %s180
      %183 = dma.hbm_to_vmem [thread:$0]  %s12, 16, %s181, [#allocation21]
    $region53: #{tpu_custom_call.1} parent=1 // pred_fallthru
      _
    // Predicated region
    $region54: #{tpu_custom_call.1} parent=1 // pred_check
      _
    $region55: #{tpu_custom_call.1} parent=1 // pred_check_branch
      %185 = sbr.rel (0) target = $region57
    $region56: #{tpu_custom_call.1} parent=1 // pred_region
      %s187 = ssub.s32 1024, 1024
      %188 = vsyncadd [#allocation24], %s187
      %s189 = sshll.u32 [#allocation23], 4
      %s190 = int_to_ptr.vmem [resolvable:$true] %s189
      %195 = dma.hbm_to_vmem [thread:$0]  %s13, 1024, %s190, [#allocation24], 64, 64, 4
    $region57: #{tpu_custom_call.1} parent=1 // pred_fallthru
      _
    // Predicated region
    $region58: #{tpu_custom_call.1} parent=1 // pred_check
      _
    $region59: #{tpu_custom_call.1} parent=1 // pred_check_branch
      %197 = sbr.rel (0) target = $region61
    $region60: #{tpu_custom_call.1} parent=1 // pred_region
      %s199 = ssub.s32 1024, 1024
      %200 = vsyncadd [#allocation24], %s199
      %s201 = sshll.u32 [#allocation25], 4
      %s202 = int_to_ptr.vmem [resolvable:$true] %s201
      %207 = dma.hbm_to_vmem [thread:$0]  %s14, 1024, %s202, [#allocation24], 64, 64, 4
    $region61: #{tpu_custom_call.1} parent=1 // pred_fallthru
      _
    // Predicated region
    $region62: #{tpu_custom_call.1} parent=1 // pred_check
      _
    $region63: #{tpu_custom_call.1} parent=1 // pred_check_branch
      %209 = sbr.rel (0) target = $region65
    $region64: #{tpu_custom_call.1} parent=1 // pred_region
      %s211 = ssub.s32 16, 16
      %212 = vsyncadd [#allocation27], %s211
      %s214 = sshll.u32 [#allocation26], 4
      %s215 = int_to_ptr.vmem [resolvable:$true] %s214
      %217 = dma.hbm_to_vmem [thread:$0]  %s15, 16, %s215, [#allocation27]
    $region65: #{tpu_custom_call.1} parent=1 // pred_fallthru
      _
    // Predicated region
    $region66: #{tpu_custom_call.1} parent=1 // pred_check
      _
    $region67: #{tpu_custom_call.1} parent=1 // pred_check_branch
      %219 = sbr.rel (0) target = $region69
    $region68: #{tpu_custom_call.1} parent=1 // pred_region
      %s221 = ssub.s32 16, 16
      %222 = vsyncadd [#allocation27], %s221
      %s224 = sshll.u32 [#allocation28], 4
      %s225 = int_to_ptr.vmem [resolvable:$true] %s224
      %227 = dma.hbm_to_vmem [thread:$0]  %s16, 16, %s225, [#allocation27]
    $region69: #{tpu_custom_call.1} parent=1 // pred_fallthru
      _
    // Predicated region
    $region70: #{tpu_custom_call.1} parent=1 // pred_check
      _
    $region71: #{tpu_custom_call.1} parent=1 // pred_check_branch
      %229 = sbr.rel (0) target = $region73
    $region72: #{tpu_custom_call.1} parent=1 // pred_region
      _
    $region73: #{tpu_custom_call.1} parent=1 // pred_fallthru
      _
    // Predicated region
    $region74: #{tpu_custom_call.1} parent=1 // pred_check
      _
    $region75: #{tpu_custom_call.1} parent=1 // pred_check_branch
      %231 = sbr.rel (0) target = $region77
    $region76: #{tpu_custom_call.1} parent=1 // pred_region
      _
    $region77: #{tpu_custom_call.1} parent=1 // pred_fallthru
      _
    // Predicated region
    $region78: #{tpu_custom_call.1} parent=1 // pred_check
      _
    $region79: #{tpu_custom_call.1} parent=1 // pred_check_branch
      %233 = sbr.rel (0) target = $region81
    $region80: #{tpu_custom_call.1} parent=1 // pred_region
      %s235 = ssub.s32 1024, 1024
      %236 = vsyncadd [#allocation30], %s235
      %s237 = sshll.u32 [#allocation29], 4
      %s238 = int_to_ptr.vmem [resolvable:$true] %s237
      %243 = dma.hbm_to_vmem [thread:$0]  %s19, 1024, %s238, [#allocation30], 64, 64, 4
    $region81: #{tpu_custom_call.1} parent=1 // pred_fallthru
      _
    // Predicated region
    $region82: #{tpu_custom_call.1} parent=1 // pred_check
      _
    $region83: #{tpu_custom_call.1} parent=1 // pred_check_branch
      %245 = sbr.rel (0) target = $region85
    $region84: #{tpu_custom_call.1} parent=1 // pred_region
      %s247 = ssub.s32 1024, 1024
      %248 = vsyncadd [#allocation30], %s247
      %s249 = sshll.u32 [#allocation31], 4
      %s250 = int_to_ptr.vmem [resolvable:$true] %s249
      %255 = dma.hbm_to_vmem [thread:$0]  %s20, 1024, %s250, [#allocation30], 64, 64, 4
    $region85: #{tpu_custom_call.1} parent=1 // pred_fallthru
      _
    // Predicated region
    $region86: #{tpu_custom_call.1} parent=1 // pred_check
      _
    $region87: #{tpu_custom_call.1} parent=1 // pred_check_branch
      %257 = sbr.rel (0) target = $region89
    $region88: #{tpu_custom_call.1} parent=1 // pred_region
      _
    $region89: #{tpu_custom_call.1} parent=1 // pred_fallthru
      _
    // Predicated region
    $region90: #{tpu_custom_call.1} parent=1 // pred_check
      _
    $region91: #{tpu_custom_call.1} parent=1 // pred_check_branch
      %259 = sbr.rel (0) target = $region93
    $region92: #{tpu_custom_call.1} parent=1 // pred_region
      _
    $region93: #{tpu_custom_call.1} parent=1 // pred_fallthru
      _
    // Predicated region
    $region94: #{tpu_custom_call.1} parent=1 // pred_check
      _
    $region95: #{tpu_custom_call.1} parent=1 // pred_check_branch
      %261 = sbr.rel (0) target = $region97
    $region96: #{tpu_custom_call.1} parent=1 // pred_region
      %s263 = ssub.s32 1024, 1024
      %264 = vsyncadd [#allocation33], %s263
      %s265 = sshll.u32 [#allocation32], 4
      %s266 = int_to_ptr.vmem [resolvable:$true] %s265
      %271 = dma.hbm_to_vmem [thread:$0]  %s23, 1024, %s266, [#allocation33], 64, 64, 4
    $region97: #{tpu_custom_call.1} parent=1 // pred_fallthru
      _
    // Predicated region
    $region98: #{tpu_custom_call.1} parent=1 // pred_check
      _
    $region99: #{tpu_custom_call.1} parent=1 // pred_check_branch
      %273 = sbr.rel (0) target = $region101
    $region100: #{tpu_custom_call.1} parent=1 // pred_region
      _
    $region101: #{tpu_custom_call.1} parent=1 // pred_fallthru
      _
    // Predicated region
    $region102: #{tpu_custom_call.1} parent=1 // pred_check
      _
    $region103: #{tpu_custom_call.1} parent=1 // pred_check_branch
      %275 = sbr.rel (0) target = $region105
    $region104: #{tpu_custom_call.1} parent=1 // pred_region
      %276 = dma.done [#allocation3], 128
    $region105: #{tpu_custom_call.1} parent=1 // pred_fallthru
      _
    // Predicated region
    $region106: #{tpu_custom_call.1} parent=1 // pred_check
      _
    $region107: #{tpu_custom_call.1} parent=1 // pred_check_branch
      %278 = sbr.rel (0) target = $region109
    $region108: #{tpu_custom_call.1} parent=1 // pred_region
      %279 = dma.done [#allocation6], 1024
    $region109: #{tpu_custom_call.1} parent=1 // pred_fallthru
      _
    // Predicated region
    $region110: #{tpu_custom_call.1} parent=1 // pred_check
      _
    $region111: #{tpu_custom_call.1} parent=1 // pred_check_branch
      %281 = sbr.rel (0) target = $region113
    $region112: #{tpu_custom_call.1} parent=1 // pred_region
      %282 = dma.done [#allocation6], 1024
    $region113: #{tpu_custom_call.1} parent=1 // pred_fallthru
      _
    // Predicated region
    $region114: #{tpu_custom_call.1} parent=1 // pred_check
      _
    $region115: #{tpu_custom_call.1} parent=1 // pred_check_branch
      %284 = sbr.rel (0) target = $region117
    $region116: #{tpu_custom_call.1} parent=1 // pred_region
      %285 = dma.done [#allocation9], 16
    $region117: #{tpu_custom_call.1} parent=1 // pred_fallthru
      _
    // Predicated region
    $region118: #{tpu_custom_call.1} parent=1 // pred_check
      _
    $region119: #{tpu_custom_call.1} parent=1 // pred_check_branch
      %287 = sbr.rel (0) target = $region121
    $region120: #{tpu_custom_call.1} parent=1 // pred_region
      %288 = dma.done [#allocation9], 16
    $region121: #{tpu_custom_call.1} parent=1 // pred_fallthru
      _
    // Predicated region
    $region122: #{tpu_custom_call.1} parent=1 // pred_check
      _
    $region123: #{tpu_custom_call.1} parent=1 // pred_check_branch
      %290 = sbr.rel (0) target = $region125
    $region124: #{tpu_custom_call.1} parent=1 // pred_region
      %291 = dma.done [#allocation12], 1024
    $region125: #{tpu_custom_call.1} parent=1 // pred_fallthru
      _
    // Predicated region
    $region126: #{tpu_custom_call.1} parent=1 // pred_check
      _
    $region127: #{tpu_custom_call.1} parent=1 // pred_check_branch
      %293 = sbr.rel (0) target = $region129
    $region128: #{tpu_custom_call.1} parent=1 // pred_region
      %294 = dma.done [#allocation12], 16
    $region129: #{tpu_custom_call.1} parent=1 // pred_fallthru
      _
    // Predicated region
    $region130: #{tpu_custom_call.1} parent=1 // pred_check
      _
    $region131: #{tpu_custom_call.1} parent=1 // pred_check_branch
      %296 = sbr.rel (0) target = $region133
    $region132: #{tpu_custom_call.1} parent=1 // pred_region
      %297 = dma.done [#allocation15], 1024
    $region133: #{tpu_custom_call.1} parent=1 // pred_fallthru
      _
    // Predicated region
    $region134: #{tpu_custom_call.1} parent=1 // pred_check
      _
    $region135: #{tpu_custom_call.1} parent=1 // pred_check_branch
      %299 = sbr.rel (0) target = $region137
    $region136: #{tpu_custom_call.1} parent=1 // pred_region
      %300 = dma.done [#allocation15], 1024
    $region137: #{tpu_custom_call.1} parent=1 // pred_fallthru
      _
    // Predicated region
    $region138: #{tpu_custom_call.1} parent=1 // pred_check
      _
    $region139: #{tpu_custom_call.1} parent=1 // pred_check_branch
      %302 = sbr.rel (0) target = $region141
    $region140: #{tpu_custom_call.1} parent=1 // pred_region
      %303 = dma.done [#allocation18], 16
    $region141: #{tpu_custom_call.1} parent=1 // pred_fallthru
      _
    // Predicated region
    $region142: #{tpu_custom_call.1} parent=1 // pred_check
      _
    $region143: #{tpu_custom_call.1} parent=1 // pred_check_branch
      %305 = sbr.rel (0) target = $region145
    $region144: #{tpu_custom_call.1} parent=1 // pred_region
      %306 = dma.done [#allocation18], 16
    $region145: #{tpu_custom_call.1} parent=1 // pred_fallthru
      _
    // Predicated region
    $region146: #{tpu_custom_call.1} parent=1 // pred_check
      _
    $region147: #{tpu_custom_call.1} parent=1 // pred_check_branch
      %308 = sbr.rel (0) target = $region149
    $region148: #{tpu_custom_call.1} parent=1 // pred_region
      %309 = dma.done [#allocation21], 1024
    $region149: #{tpu_custom_call.1} parent=1 // pred_fallthru
      _
    // Predicated region
    $region150: #{tpu_custom_call.1} parent=1 // pred_check
      _
    $region151: #{tpu_custom_call.1} parent=1 // pred_check_branch
      %311 = sbr.rel (0) target = $region153
    $region152: #{tpu_custom_call.1} parent=1 // pred_region
      %312 = dma.done [#allocation21], 16
    $region153: #{tpu_custom_call.1} parent=1 // pred_fallthru
      _
    // Predicated region
    $region154: #{tpu_custom_call.1} parent=1 // pred_check
      _
    $region155: #{tpu_custom_call.1} parent=1 // pred_check_branch
      %314 = sbr.rel (0) target = $region157
    $region156: #{tpu_custom_call.1} parent=1 // pred_region
      %315 = dma.done [#allocation24], 1024
    $region157: #{tpu_custom_call.1} parent=1 // pred_fallthru
      _
    // Predicated region
    $region158: #{tpu_custom_call.1} parent=1 // pred_check
      _
    $region159: #{tpu_custom_call.1} parent=1 // pred_check_branch
      %317 = sbr.rel (0) target = $region161
    $region160: #{tpu_custom_call.1} parent=1 // pred_region
      %318 = dma.done [#allocation24], 1024
    $region161: #{tpu_custom_call.1} parent=1 // pred_fallthru
      _
    // Predicated region
    $region162: #{tpu_custom_call.1} parent=1 // pred_check
      _
    $region163: #{tpu_custom_call.1} parent=1 // pred_check_branch
      %320 = sbr.rel (0) target = $region165
    $region164: #{tpu_custom_call.1} parent=1 // pred_region
      %321 = dma.done [#allocation27], 16
    $region165: #{tpu_custom_call.1} parent=1 // pred_fallthru
      _
    // Predicated region
    $region166: #{tpu_custom_call.1} parent=1 // pred_check
      _
    $region167: #{tpu_custom_call.1} parent=1 // pred_check_branch
      %323 = sbr.rel (0) target = $region169
    $region168: #{tpu_custom_call.1} parent=1 // pred_region
      %324 = dma.done [#allocation27], 16
    $region169: #{tpu_custom_call.1} parent=1 // pred_fallthru
      _
    // Predicated region
    $region170: #{tpu_custom_call.1} parent=1 // pred_check
      _
    $region171: #{tpu_custom_call.1} parent=1 // pred_check_branch
      %326 = sbr.rel (0) target = $region173
    $region172: #{tpu_custom_call.1} parent=1 // pred_region
      %327 = dma.done [#allocation30], 1024
    $region173: #{tpu_custom_call.1} parent=1 // pred_fallthru
      _
    // Predicated region
    $region174: #{tpu_custom_call.1} parent=1 // pred_check
      _
    $region175: #{tpu_custom_call.1} parent=1 // pred_check_branch
      %329 = sbr.rel (0) target = $region177
    $region176: #{tpu_custom_call.1} parent=1 // pred_region
      %330 = dma.done [#allocation30], 1024
    $region177: #{tpu_custom_call.1} parent=1 // pred_fallthru
      _
    // Predicated region
    $region178: #{tpu_custom_call.1} parent=1 // pred_check
      _
    $region179: #{tpu_custom_call.1} parent=1 // pred_check_branch
      %332 = sbr.rel (0) target = $region181
    $region180: #{tpu_custom_call.1} parent=1 // pred_region
      %333 = dma.done [#allocation33], 1024
    $region181: #{tpu_custom_call.1} parent=1 // pred_fallthru
      _
    %v335 = vld [vmem:[#allocation2] sm:$0xff]
    %v336 = vld [vmem:[#allocation7] sm:$0xf]
    %v337 = vld [vmem:[#allocation7 + $0x4] sm:$0xf]
    %v338 = vld [vmem:[#allocation7 + $0x8] sm:$0xf]
    %v339 = vld [vmem:[#allocation7 + $0xc] sm:$0xf]
    %v340 = vld [vmem:[#allocation7 + $0x10] sm:$0xf]
    %v341 = vld [vmem:[#allocation7 + $0x14] sm:$0xf]
    %v342 = vld [vmem:[#allocation7 + $0x18] sm:$0xf]
    %v343 = vld [vmem:[#allocation7 + $0x1c] sm:$0xf]
    %v344 = vld [vmem:[#allocation7 + $0x20] sm:$0xf]
    %v345 = vld [vmem:[#allocation7 + $0x24] sm:$0xf]
    %v346 = vld [vmem:[#allocation7 + $0x28] sm:$0xf]
    %v347 = vld [vmem:[#allocation7 + $0x2c] sm:$0xf]
    %v348 = vld [vmem:[#allocation7 + $0x30] sm:$0xf]
    %v349 = vld [vmem:[#allocation7 + $0x34] sm:$0xf]
    %v350 = vld [vmem:[#allocation7 + $0x38] sm:$0xf]
    %v351 = vld [vmem:[#allocation7 + $0x3c] sm:$0xf]
    %v352 = vunpack.c.l.bf16 %v336
    %v353 = vunpack.c.l.bf16 %v337
    %v354 = vunpack.c.l.bf16 %v338
    %v355 = vunpack.c.l.bf16 %v339
    %v356 = vunpack.c.l.bf16 %v340
    %v357 = vunpack.c.l.bf16 %v341
    %v358 = vunpack.c.l.bf16 %v342
    %v359 = vunpack.c.l.bf16 %v343
    %v360 = vunpack.c.l.bf16 %v344
    %v361 = vunpack.c.l.bf16 %v345
    %v362 = vunpack.c.l.bf16 %v346
    %v363 = vunpack.c.l.bf16 %v347
    %v364 = vunpack.c.l.bf16 %v348
    %v365 = vunpack.c.l.bf16 %v349
    %v366 = vunpack.c.l.bf16 %v350
    %v367 = vunpack.c.l.bf16 %v351
    %v368 = vmul.f32 %v352, 0.5
    %v369 = vmul.f32 %v353, 0.5
    %v370 = vmul.f32 %v354, 0.5
    %v371 = vmul.f32 %v355, 0.5
    %v372 = vmul.f32 %v356, 0.5
    %v373 = vmul.f32 %v357, 0.5
    %v374 = vmul.f32 %v358, 0.5
    %v375 = vmul.f32 %v359, 0.5
    %v376 = vmul.f32 %v360, 0.5
    %v377 = vmul.f32 %v361, 0.5
    %v378 = vmul.f32 %v362, 0.5
    %v379 = vmul.f32 %v363, 0.5
    %v380 = vmul.f32 %v364, 0.5
    %v381 = vmul.f32 %v365, 0.5
    %v382 = vmul.f32 %v366, 0.5
    %v383 = vmul.f32 %v367, 0.5
    %v384 = vmul.f32 %v368, 1.442695
    %v385 = vpow.pop %v384
    %v386 = vmul.f32 %v369, 1.442695
    %v387 = vpow.pop %v386
    %v388 = vmul.f32 %v370, 1.442695
    %v389 = vpow.pop %v388
    %v390 = vmul.f32 %v371, 1.442695
    %v391 = vpow.pop %v390
    %v392 = vmul.f32 %v372, 1.442695
    %v393 = vpow.pop %v392
    %v394 = vmul.f32 %v373, 1.442695
    %v395 = vpow.pop %v394
    %v396 = vmul.f32 %v374, 1.442695
    %v397 = vpow.pop %v396
    %v398 = vmul.f32 %v375, 1.442695
    %v399 = vpow.pop %v398
    %v400 = vmul.f32 %v376, 1.442695
    %v401 = vpow.pop %v400
    %v402 = vmul.f32 %v377, 1.442695
    %v403 = vpow.pop %v402
    %v404 = vmul.f32 %v378, 1.442695
    %v405 = vpow.pop %v404
    %v406 = vmul.f32 %v379, 1.442695
    %v407 = vpow.pop %v406
    %v408 = vmul.f32 %v380, 1.442695
    %v409 = vpow.pop %v408
    %v410 = vmul.f32 %v381, 1.442695
    %v411 = vpow.pop %v410
    %v412 = vmul.f32 %v382, 1.442695
    %v413 = vpow.pop %v412
    %v414 = vmul.f32 %v383, 1.442695
    %v415 = vpow.pop %v414
    %v416 = vld [vmem:[#allocation5] sm:$0xf]
    %v417 = vld [vmem:[#allocation5 + $0x4] sm:$0xf]
    %v418 = vld [vmem:[#allocation5 + $0x8] sm:$0xf]
    %v419 = vld [vmem:[#allocation5 + $0xc] sm:$0xf]
    %v420 = vld [vmem:[#allocation5 + $0x10] sm:$0xf]
    %v421 = vld [vmem:[#allocation5 + $0x14] sm:$0xf]
    %v422 = vld [vmem:[#allocation5 + $0x18] sm:$0xf]
    %v423 = vld [vmem:[#allocation5 + $0x1c] sm:$0xf]
    %v424 = vld [vmem:[#allocation5 + $0x20] sm:$0xf]
    %v425 = vld [vmem:[#allocation5 + $0x24] sm:$0xf]
    %v426 = vld [vmem:[#allocation5 + $0x28] sm:$0xf]
    %v427 = vld [vmem:[#allocation5 + $0x2c] sm:$0xf]
    %v428 = vld [vmem:[#allocation5 + $0x30] sm:$0xf]
    %v429 = vld [vmem:[#allocation5 + $0x34] sm:$0xf]
    %v430 = vld [vmem:[#allocation5 + $0x38] sm:$0xf]
    %v431 = vld [vmem:[#allocation5 + $0x3c] sm:$0xf]
    %v432 = vunpack.c.l.bf16 %v416
    %v433 = vunpack.c.l.bf16 %v417
    %v434 = vunpack.c.l.bf16 %v418
    %v435 = vunpack.c.l.bf16 %v419
    %v436 = vunpack.c.l.bf16 %v420
    %v437 = vunpack.c.l.bf16 %v421
    %v438 = vunpack.c.l.bf16 %v422
    %v439 = vunpack.c.l.bf16 %v423
    %v440 = vunpack.c.l.bf16 %v424
    %v441 = vunpack.c.l.bf16 %v425
    %v442 = vunpack.c.l.bf16 %v426
    %v443 = vunpack.c.l.bf16 %v427
    %v444 = vunpack.c.l.bf16 %v428
    %v445 = vunpack.c.l.bf16 %v429
    %v446 = vunpack.c.l.bf16 %v430
    %v447 = vunpack.c.l.bf16 %v431
    %v448 = vld [vmem:[#allocation11] sm:$0xf]
    %v449 = vld [vmem:[#allocation11 + $0x4] sm:$0xf]
    %v450 = vld [vmem:[#allocation11 + $0x8] sm:$0xf]
    %v451 = vld [vmem:[#allocation11 + $0xc] sm:$0xf]
    %v452 = vld [vmem:[#allocation11 + $0x10] sm:$0xf]
    %v453 = vld [vmem:[#allocation11 + $0x14] sm:$0xf]
    %v454 = vld [vmem:[#allocation11 + $0x18] sm:$0xf]
    %v455 = vld [vmem:[#allocation11 + $0x1c] sm:$0xf]
    %v456 = vld [vmem:[#allocation11 + $0x20] sm:$0xf]
    %v457 = vld [vmem:[#allocation11 + $0x24] sm:$0xf]
    %v458 = vld [vmem:[#allocation11 + $0x28] sm:$0xf]
    %v459 = vld [vmem:[#allocation11 + $0x2c] sm:$0xf]
    %v460 = vld [vmem:[#allocation11 + $0x30] sm:$0xf]
    %v461 = vld [vmem:[#allocation11 + $0x34] sm:$0xf]
    %v462 = vld [vmem:[#allocation11 + $0x38] sm:$0xf]
    %v463 = vld [vmem:[#allocation11 + $0x3c] sm:$0xf]
    %v464 = vunpack.c.l.bf16 %v448
    %v465 = vunpack.c.l.bf16 %v449
    %v466 = vunpack.c.l.bf16 %v450
    %v467 = vunpack.c.l.bf16 %v451
    %v468 = vunpack.c.l.bf16 %v452
    %v469 = vunpack.c.l.bf16 %v453
    %v470 = vunpack.c.l.bf16 %v454
    %v471 = vunpack.c.l.bf16 %v455
    %v472 = vunpack.c.l.bf16 %v456
    %v473 = vunpack.c.l.bf16 %v457
    %v474 = vunpack.c.l.bf16 %v458
    %v475 = vunpack.c.l.bf16 %v459
    %v476 = vunpack.c.l.bf16 %v460
    %v477 = vunpack.c.l.bf16 %v461
    %v478 = vunpack.c.l.bf16 %v462
    %v479 = vunpack.c.l.bf16 %v463
    %v480 = vmul.f32 %v385, %v464
    %v481 = vmul.f32 %v387, %v465
    %v482 = vmul.f32 %v389, %v466
    %v483 = vmul.f32 %v391, %v467
    %v484 = vmul.f32 %v393, %v468
    %v485 = vmul.f32 %v395, %v469
    %v486 = vmul.f32 %v397, %v470
    %v487 = vmul.f32 %v399, %v471
    %v488 = vmul.f32 %v401, %v472
    %v489 = vmul.f32 %v403, %v473
    %v490 = vmul.f32 %v405, %v474
    %v491 = vmul.f32 %v407, %v475
    %v492 = vmul.f32 %v409, %v476
    %v493 = vmul.f32 %v411, %v477
    %v494 = vmul.f32 %v413, %v478
    %v495 = vmul.f32 %v415, %v479
    %v496 = vadd.f32 %v432, %v480
    %v497 = vadd.f32 %v433, %v481
    %v498 = vadd.f32 %v434, %v482
    %v499 = vadd.f32 %v435, %v483
    %v500 = vadd.f32 %v436, %v484
    %v501 = vadd.f32 %v437, %v485
    %v502 = vadd.f32 %v438, %v486
    %v503 = vadd.f32 %v439, %v487
    %v504 = vadd.f32 %v440, %v488
    %v505 = vadd.f32 %v441, %v489
    %v506 = vadd.f32 %v442, %v490
    %v507 = vadd.f32 %v443, %v491
    %v508 = vadd.f32 %v444, %v492
    %v509 = vadd.f32 %v445, %v493
    %v510 = vadd.f32 %v446, %v494
    %v511 = vadd.f32 %v447, %v495
    %v512 = vld [vmem:[#allocation10] sm:$0x1]
    %v513 = vunpack.c.l.bf16 %v512
    %v514 = vmul.f32 %v513, 0.5
    %v515 = vmul.f32 %v514, 1.442695
    %v516 = vpow.pop %v515
    %v517 = vld [vmem:[#allocation8] sm:$0x1]
    %v518 = vunpack.c.l.bf16 %v517
    %v519 = vld [vmem:[#allocation13] sm:$0x1]
    %v520 = vunpack.c.l.bf16 %v519
    %v521 = vmul.f32 %v516, %v520
    %v522 = vadd.f32 %v518, %v521
    %v523 = vpack.c.bf16 %v335, %v335
    %v524 = vpack.c.bf16 %v497, %v496
    %v525 = vpack.c.bf16 %v499, %v498
    %v526 = vpack.c.bf16 %v501, %v500
    %v527 = vpack.c.bf16 %v503, %v502
    %v528 = vpack.c.bf16 %v505, %v504
    %v529 = vpack.c.bf16 %v507, %v506
    %v530 = vpack.c.bf16 %v509, %v508
    %v531 = vpack.c.bf16 %v511, %v510
    %v532 = vlaneseq
    %v533 = vshrl.u32 %v532, 7
    %v534 = vsub.s32 0, %v533
    %v535 = vrot.slane %v522, %v534
    %536 = vmatprep.subr.bf16.mxu0 0
    %537 = vmatpush1.bf16.msra.mxu0 %v524
    %538 = vmatprep.subr.bf16.mxu0 0
    %539 = vmatpush1.bf16.msra.mxu0 %v525
    %540 = vmatprep.subr.bf16.mxu0 0
    %541 = vmatpush1.bf16.msra.mxu0 %v526
    %542 = vmatprep.subr.bf16.mxu0 0
    %543 = vmatpush1.bf16.msra.mxu0 %v527
    %544 = vmatprep.subr.bf16.mxu0 0
    %545 = vmatpush1.bf16.msra.mxu0 %v528
    %546 = vmatprep.subr.bf16.mxu0 0
    %547 = vmatpush1.bf16.msra.mxu0 %v529
    %548 = vmatprep.subr.bf16.mxu0 0
    %549 = vmatpush1.bf16.msra.mxu0 %v530
    %550 = vmatprep.subr.bf16.mxu0 0
    %551 = vmatpush1.bf16.msra.mxu0 %v531
    %552 = vmatprep.subr.bf16.mxu0 0
    %553 = vmatpush1.bf16.msra.mxu0 0
    %554 = vmatprep.subr.bf16.mxu0 0
    %555 = vmatpush1.bf16.msra.mxu0 0
    %556 = vmatprep.subr.bf16.mxu0 0
    %557 = vmatpush1.bf16.msra.mxu0 0
    %558 = vmatprep.subr.bf16.mxu0 0
    %559 = vmatpush1.bf16.msra.mxu0 0
    %560 = vmatprep.subr.bf16.mxu0 0
    %561 = vmatpush1.bf16.msra.mxu0 0
    %562 = vmatprep.subr.bf16.mxu0 0
    %563 = vmatpush1.bf16.msra.mxu0 0
    %564 = vmatprep.subr.bf16.mxu0 0
    %565 = vmatpush1.bf16.msra.mxu0 0
    %566 = vmatprep.subr.bf16.mxu0 0
    %567 = vmatpush1.bf16.msra.mxu0 0
    %568 = vmatprep.mubr.bf16.mxu0 0
    %569 = vmatmul.mubr.bf16.gmra.mrb[0].mxu0 %v523
    %v570 = vpop.f32.mrb[0].mxu0
    %v571 = vadd.f32 %v535, %v570
    %v572 = vpop.f32.mrb[0].mxu0
    %v573 = vpop.f32.mrb[0].mxu0
    %v574 = vpop.f32.mrb[0].mxu0
    %575 = vdwg.mxu0
    %v576 = vmax.f32 %v571, 0.0
    %v577 = vld [vmem:[#allocation16] sm:$0xf]
    %v578 = vld [vmem:[#allocation16 + $0x4] sm:$0xf]
    %v579 = vld [vmem:[#allocation16 + $0x8] sm:$0xf]
    %v580 = vld [vmem:[#allocation16 + $0xc] sm:$0xf]
    %v581 = vld [vmem:[#allocation16 + $0x10] sm:$0xf]
    %v582 = vld [vmem:[#allocation16 + $0x14] sm:$0xf]
    %v583 = vld [vmem:[#allocation16 + $0x18] sm:$0xf]
    %v584 = vld [vmem:[#allocation16 + $0x1c] sm:$0xf]
    %v585 = vld [vmem:[#allocation16 + $0x20] sm:$0xf]
    %v586 = vld [vmem:[#allocation16 + $0x24] sm:$0xf]
    %v587 = vld [vmem:[#allocation16 + $0x28] sm:$0xf]
    %v588 = vld [vmem:[#allocation16 + $0x2c] sm:$0xf]
    %v589 = vld [vmem:[#allocation16 + $0x30] sm:$0xf]
    %v590 = vld [vmem:[#allocation16 + $0x34] sm:$0xf]
    %v591 = vld [vmem:[#allocation16 + $0x38] sm:$0xf]
    %v592 = vld [vmem:[#allocation16 + $0x3c] sm:$0xf]
    %v593 = vunpack.c.l.bf16 %v577
    %v594 = vunpack.c.l.bf16 %v578
    %v595 = vunpack.c.l.bf16 %v579
    %v596 = vunpack.c.l.bf16 %v580
    %v597 = vunpack.c.l.bf16 %v581
    %v598 = vunpack.c.l.bf16 %v582
    %v599 = vunpack.c.l.bf16 %v583
    %v600 = vunpack.c.l.bf16 %v584
    %v601 = vunpack.c.l.bf16 %v585
    %v602 = vunpack.c.l.bf16 %v586
    %v603 = vunpack.c.l.bf16 %v587
    %v604 = vunpack.c.l.bf16 %v588
    %v605 = vunpack.c.l.bf16 %v589
    %v606 = vunpack.c.l.bf16 %v590
    %v607 = vunpack.c.l.bf16 %v591
    %v608 = vunpack.c.l.bf16 %v592
    %v609 = vmul.f32 %v593, 0.5
    %v610 = vmul.f32 %v594, 0.5
    %v611 = vmul.f32 %v595, 0.5
    %v612 = vmul.f32 %v596, 0.5
    %v613 = vmul.f32 %v597, 0.5
    %v614 = vmul.f32 %v598, 0.5
    %v615 = vmul.f32 %v599, 0.5
    %v616 = vmul.f32 %v600, 0.5
    %v617 = vmul.f32 %v601, 0.5
    %v618 = vmul.f32 %v602, 0.5
    %v619 = vmul.f32 %v603, 0.5
    %v620 = vmul.f32 %v604, 0.5
    %v621 = vmul.f32 %v605, 0.5
    %v622 = vmul.f32 %v606, 0.5
    %v623 = vmul.f32 %v607, 0.5
    %v624 = vmul.f32 %v608, 0.5
    %v625 = vmul.f32 %v609, 1.442695
    %v626 = vpow.pop %v625
    %v627 = vmul.f32 %v610, 1.442695
    %v628 = vpow.pop %v627
    %v629 = vmul.f32 %v611, 1.442695
    %v630 = vpow.pop %v629
    %v631 = vmul.f32 %v612, 1.442695
    %v632 = vpow.pop %v631
    %v633 = vmul.f32 %v613, 1.442695
    %v634 = vpow.pop %v633
    %v635 = vmul.f32 %v614, 1.442695
    %v636 = vpow.pop %v635
    %v637 = vmul.f32 %v615, 1.442695
    %v638 = vpow.pop %v637
    %v639 = vmul.f32 %v616, 1.442695
    %v640 = vpow.pop %v639
    %v641 = vmul.f32 %v617, 1.442695
    %v642 = vpow.pop %v641
    %v643 = vmul.f32 %v618, 1.442695
    %v644 = vpow.pop %v643
    %v645 = vmul.f32 %v619, 1.442695
    %v646 = vpow.pop %v645
    %v647 = vmul.f32 %v620, 1.442695
    %v648 = vpow.pop %v647
    %v649 = vmul.f32 %v621, 1.442695
    %v650 = vpow.pop %v649
    %v651 = vmul.f32 %v622, 1.442695
    %v652 = vpow.pop %v651
    %v653 = vmul.f32 %v623, 1.442695
    %v654 = vpow.pop %v653
    %v655 = vmul.f32 %v624, 1.442695
    %v656 = vpow.pop %v655
    %v657 = vld [vmem:[#allocation14] sm:$0xf]
    %v658 = vld [vmem:[#allocation14 + $0x4] sm:$0xf]
    %v659 = vld [vmem:[#allocation14 + $0x8] sm:$0xf]
    %v660 = vld [vmem:[#allocation14 + $0xc] sm:$0xf]
    %v661 = vld [vmem:[#allocation14 + $0x10] sm:$0xf]
    %v662 = vld [vmem:[#allocation14 + $0x14] sm:$0xf]
    %v663 = vld [vmem:[#allocation14 + $0x18] sm:$0xf]
    %v664 = vld [vmem:[#allocation14 + $0x1c] sm:$0xf]
    %v665 = vld [vmem:[#allocation14 + $0x20] sm:$0xf]
    %v666 = vld [vmem:[#allocation14 + $0x24] sm:$0xf]
    %v667 = vld [vmem:[#allocation14 + $0x28] sm:$0xf]
    %v668 = vld [vmem:[#allocation14 + $0x2c] sm:$0xf]
    %v669 = vld [vmem:[#allocation14 + $0x30] sm:$0xf]
    %v670 = vld [vmem:[#allocation14 + $0x34] sm:$0xf]
    %v671 = vld [vmem:[#allocation14 + $0x38] sm:$0xf]
    %v672 = vld [vmem:[#allocation14 + $0x3c] sm:$0xf]
    %v673 = vunpack.c.l.bf16 %v657
    %v674 = vunpack.c.l.bf16 %v658
    %v675 = vunpack.c.l.bf16 %v659
    %v676 = vunpack.c.l.bf16 %v660
    %v677 = vunpack.c.l.bf16 %v661
    %v678 = vunpack.c.l.bf16 %v662
    %v679 = vunpack.c.l.bf16 %v663
    %v680 = vunpack.c.l.bf16 %v664
    %v681 = vunpack.c.l.bf16 %v665
    %v682 = vunpack.c.l.bf16 %v666
    %v683 = vunpack.c.l.bf16 %v667
    %v684 = vunpack.c.l.bf16 %v668
    %v685 = vunpack.c.l.bf16 %v669
    %v686 = vunpack.c.l.bf16 %v670
    %v687 = vunpack.c.l.bf16 %v671
    %v688 = vunpack.c.l.bf16 %v672
    %v689 = vld [vmem:[#allocation20] sm:$0xf]
    %v690 = vld [vmem:[#allocation20 + $0x4] sm:$0xf]
    %v691 = vld [vmem:[#allocation20 + $0x8] sm:$0xf]
    %v692 = vld [vmem:[#allocation20 + $0xc] sm:$0xf]
    %v693 = vld [vmem:[#allocation20 + $0x10] sm:$0xf]
    %v694 = vld [vmem:[#allocation20 + $0x14] sm:$0xf]
    %v695 = vld [vmem:[#allocation20 + $0x18] sm:$0xf]
    %v696 = vld [vmem:[#allocation20 + $0x1c] sm:$0xf]
    %v697 = vld [vmem:[#allocation20 + $0x20] sm:$0xf]
    %v698 = vld [vmem:[#allocation20 + $0x24] sm:$0xf]
    %v699 = vld [vmem:[#allocation20 + $0x28] sm:$0xf]
    %v700 = vld [vmem:[#allocation20 + $0x2c] sm:$0xf]
    %v701 = vld [vmem:[#allocation20 + $0x30] sm:$0xf]
    %v702 = vld [vmem:[#allocation20 + $0x34] sm:$0xf]
    %v703 = vld [vmem:[#allocation20 + $0x38] sm:$0xf]
    %v704 = vld [vmem:[#allocation20 + $0x3c] sm:$0xf]
    %v705 = vunpack.c.l.bf16 %v689
    %v706 = vunpack.c.l.bf16 %v690
    %v707 = vunpack.c.l.bf16 %v691
    %v708 = vunpack.c.l.bf16 %v692
    %v709 = vunpack.c.l.bf16 %v693
    %v710 = vunpack.c.l.bf16 %v694
    %v711 = vunpack.c.l.bf16 %v695
    %v712 = vunpack.c.l.bf16 %v696
    %v713 = vunpack.c.l.bf16 %v697
    %v714 = vunpack.c.l.bf16 %v698
    %v715 = vunpack.c.l.bf16 %v699
    %v716 = vunpack.c.l.bf16 %v700
    %v717 = vunpack.c.l.bf16 %v701
    %v718 = vunpack.c.l.bf16 %v702
    %v719 = vunpack.c.l.bf16 %v703
    %v720 = vunpack.c.l.bf16 %v704
    %v721 = vmul.f32 %v626, %v705
    %v722 = vmul.f32 %v628, %v706
    %v723 = vmul.f32 %v630, %v707
    %v724 = vmul.f32 %v632, %v708
    %v725 = vmul.f32 %v634, %v709
    %v726 = vmul.f32 %v636, %v710
    %v727 = vmul.f32 %v638, %v711
    %v728 = vmul.f32 %v640, %v712
    %v729 = vmul.f32 %v642, %v713
    %v730 = vmul.f32 %v644, %v714
    %v731 = vmul.f32 %v646, %v715
    %v732 = vmul.f32 %v648, %v716
    %v733 = vmul.f32 %v650, %v717
    %v734 = vmul.f32 %v652, %v718
    %v735 = vmul.f32 %v654, %v719
    %v736 = vmul.f32 %v656, %v720
    %v737 = vadd.f32 %v673, %v721
    %v738 = vadd.f32 %v674, %v722
    %v739 = vadd.f32 %v675, %v723
    %v740 = vadd.f32 %v676, %v724
    %v741 = vadd.f32 %v677, %v725
    %v742 = vadd.f32 %v678, %v726
    %v743 = vadd.f32 %v679, %v727
    %v744 = vadd.f32 %v680, %v728
    %v745 = vadd.f32 %v681, %v729
    %v746 = vadd.f32 %v682, %v730
    %v747 = vadd.f32 %v683, %v731
    %v748 = vadd.f32 %v684, %v732
    %v749 = vadd.f32 %v685, %v733
    %v750 = vadd.f32 %v686, %v734
    %v751 = vadd.f32 %v687, %v735
    %v752 = vadd.f32 %v688, %v736
    %v753 = vld [vmem:[#allocation19] sm:$0x1]
    %v754 = vunpack.c.l.bf16 %v753
    %v755 = vmul.f32 %v754, 0.5
    %v756 = vmul.f32 %v755, 1.442695
    %v757 = vpow.pop %v756
    %v758 = vld [vmem:[#allocation17] sm:$0x1]
    %v759 = vunpack.c.l.bf16 %v758
    %v760 = vld [vmem:[#allocation22] sm:$0x1]
    %v761 = vunpack.c.l.bf16 %v760
    %v762 = vmul.f32 %v757, %v761
    %v763 = vadd.f32 %v759, %v762
    %v764 = vpack.c.bf16 %v576, %v576
    %v765 = vpack.c.bf16 %v738, %v737
    %v766 = vpack.c.bf16 %v740, %v739
    %v767 = vpack.c.bf16 %v742, %v741
    %v768 = vpack.c.bf16 %v744, %v743
    %v769 = vpack.c.bf16 %v746, %v745
    %v770 = vpack.c.bf16 %v748, %v747
    %v771 = vpack.c.bf16 %v750, %v749
    %v772 = vpack.c.bf16 %v752, %v751
    %v773 = vlaneseq
    %v774 = vshrl.u32 %v773, 7
    %v775 = vsub.s32 0, %v774
    %v776 = vrot.slane %v763, %v775
    %777 = vmatprep.subr.bf16.mxu0 0
    %778 = vmatpush1.bf16.msra.mxu0 %v765
    %779 = vmatprep.subr.bf16.mxu0 0
    %780 = vmatpush1.bf16.msra.mxu0 %v766
    %781 = vmatprep.subr.bf16.mxu0 0
    %782 = vmatpush1.bf16.msra.mxu0 %v767
    %783 = vmatprep.subr.bf16.mxu0 0
    %784 = vmatpush1.bf16.msra.mxu0 %v768
    %785 = vmatprep.subr.bf16.mxu0 0
    %786 = vmatpush1.bf16.msra.mxu0 %v769
    %787 = vmatprep.subr.bf16.mxu0 0
    %788 = vmatpush1.bf16.msra.mxu0 %v770
    %789 = vmatprep.subr.bf16.mxu0 0
    %790 = vmatpush1.bf16.msra.mxu0 %v771
    %791 = vmatprep.subr.bf16.mxu0 0
    %792 = vmatpush1.bf16.msra.mxu0 %v772
    %793 = vmatprep.subr.bf16.mxu0 0
    %794 = vmatpush1.bf16.msra.mxu0 0
    %795 = vmatprep.subr.bf16.mxu0 0
    %796 = vmatpush1.bf16.msra.mxu0 0
    %797 = vmatprep.subr.bf16.mxu0 0
    %798 = vmatpush1.bf16.msra.mxu0 0
    %799 = vmatprep.subr.bf16.mxu0 0
    %800 = vmatpush1.bf16.msra.mxu0 0
    %801 = vmatprep.subr.bf16.mxu0 0
    %802 = vmatpush1.bf16.msra.mxu0 0
    %803 = vmatprep.subr.bf16.mxu0 0
    %804 = vmatpush1.bf16.msra.mxu0 0
    %805 = vmatprep.subr.bf16.mxu0 0
    %806 = vmatpush1.bf16.msra.mxu0 0
    %807 = vmatprep.subr.bf16.mxu0 0
    %808 = vmatpush1.bf16.msra.mxu0 0
    %809 = vmatprep.mubr.bf16.mxu0 0
    %810 = vmatmul.mubr.bf16.gmra.mrb[0].mxu0 %v764
    %v811 = vpop.f32.mrb[0].mxu0
    %v812 = vadd.f32 %v776, %v811
    %v813 = vpop.f32.mrb[0].mxu0
    %v814 = vpop.f32.mrb[0].mxu0
    %v815 = vpop.f32.mrb[0].mxu0
    %816 = vdwg.mxu0
    %v817 = vmax.f32 %v812, 0.0
    %v818 = vld [vmem:[#allocation25] sm:$0xf]
    %v819 = vld [vmem:[#allocation25 + $0x4] sm:$0xf]
    %v820 = vld [vmem:[#allocation25 + $0x8] sm:$0xf]
    %v821 = vld [vmem:[#allocation25 + $0xc] sm:$0xf]
    %v822 = vld [vmem:[#allocation25 + $0x10] sm:$0xf]
    %v823 = vld [vmem:[#allocation25 + $0x14] sm:$0xf]
    %v824 = vld [vmem:[#allocation25 + $0x18] sm:$0xf]
    %v825 = vld [vmem:[#allocation25 + $0x1c] sm:$0xf]
    %v826 = vld [vmem:[#allocation25 + $0x20] sm:$0xf]
    %v827 = vld [vmem:[#allocation25 + $0x24] sm:$0xf]
    %v828 = vld [vmem:[#allocation25 + $0x28] sm:$0xf]
    %v829 = vld [vmem:[#allocation25 + $0x2c] sm:$0xf]
    %v830 = vld [vmem:[#allocation25 + $0x30] sm:$0xf]
    %v831 = vld [vmem:[#allocation25 + $0x34] sm:$0xf]
    %v832 = vld [vmem:[#allocation25 + $0x38] sm:$0xf]
    %v833 = vld [vmem:[#allocation25 + $0x3c] sm:$0xf]
    %v834 = vunpack.c.l.bf16 %v818
    %v835 = vunpack.c.l.bf16 %v819
    %v836 = vunpack.c.l.bf16 %v820
    %v837 = vunpack.c.l.bf16 %v821
    %v838 = vunpack.c.l.bf16 %v822
    %v839 = vunpack.c.l.bf16 %v823
    %v840 = vunpack.c.l.bf16 %v824
    %v841 = vunpack.c.l.bf16 %v825
    %v842 = vunpack.c.l.bf16 %v826
    %v843 = vunpack.c.l.bf16 %v827
    %v844 = vunpack.c.l.bf16 %v828
    %v845 = vunpack.c.l.bf16 %v829
    %v846 = vunpack.c.l.bf16 %v830
    %v847 = vunpack.c.l.bf16 %v831
    %v848 = vunpack.c.l.bf16 %v832
    %v849 = vunpack.c.l.bf16 %v833
    %v850 = vmul.f32 %v834, 0.5
    %v851 = vmul.f32 %v835, 0.5
    %v852 = vmul.f32 %v836, 0.5
    %v853 = vmul.f32 %v837, 0.5
    %v854 = vmul.f32 %v838, 0.5
    %v855 = vmul.f32 %v839, 0.5
    %v856 = vmul.f32 %v840, 0.5
    %v857 = vmul.f32 %v841, 0.5
    %v858 = vmul.f32 %v842, 0.5
    %v859 = vmul.f32 %v843, 0.5
    %v860 = vmul.f32 %v844, 0.5
    %v861 = vmul.f32 %v845, 0.5
    %v862 = vmul.f32 %v846, 0.5
    %v863 = vmul.f32 %v847, 0.5
    %v864 = vmul.f32 %v848, 0.5
    %v865 = vmul.f32 %v849, 0.5
    %v866 = vmul.f32 %v850, 1.442695
    %v867 = vpow.pop %v866
    %v868 = vmul.f32 %v851, 1.442695
    %v869 = vpow.pop %v868
    %v870 = vmul.f32 %v852, 1.442695
    %v871 = vpow.pop %v870
    %v872 = vmul.f32 %v853, 1.442695
    %v873 = vpow.pop %v872
    %v874 = vmul.f32 %v854, 1.442695
    %v875 = vpow.pop %v874
    %v876 = vmul.f32 %v855, 1.442695
    %v877 = vpow.pop %v876
    %v878 = vmul.f32 %v856, 1.442695
    %v879 = vpow.pop %v878
    %v880 = vmul.f32 %v857, 1.442695
    %v881 = vpow.pop %v880
    %v882 = vmul.f32 %v858, 1.442695
    %v883 = vpow.pop %v882
    %v884 = vmul.f32 %v859, 1.442695
    %v885 = vpow.pop %v884
    %v886 = vmul.f32 %v860, 1.442695
    %v887 = vpow.pop %v886
    %v888 = vmul.f32 %v861, 1.442695
    %v889 = vpow.pop %v888
    %v890 = vmul.f32 %v862, 1.442695
    %v891 = vpow.pop %v890
    %v892 = vmul.f32 %v863, 1.442695
    %v893 = vpow.pop %v892
    %v894 = vmul.f32 %v864, 1.442695
    %v895 = vpow.pop %v894
    %v896 = vmul.f32 %v865, 1.442695
    %v897 = vpow.pop %v896
    %v898 = vld [vmem:[#allocation23] sm:$0xf]
    %v899 = vld [vmem:[#allocation23 + $0x4] sm:$0xf]
    %v900 = vld [vmem:[#allocation23 + $0x8] sm:$0xf]
    %v901 = vld [vmem:[#allocation23 + $0xc] sm:$0xf]
    %v902 = vld [vmem:[#allocation23 + $0x10] sm:$0xf]
    %v903 = vld [vmem:[#allocation23 + $0x14] sm:$0xf]
    %v904 = vld [vmem:[#allocation23 + $0x18] sm:$0xf]
    %v905 = vld [vmem:[#allocation23 + $0x1c] sm:$0xf]
    %v906 = vld [vmem:[#allocation23 + $0x20] sm:$0xf]
    %v907 = vld [vmem:[#allocation23 + $0x24] sm:$0xf]
    %v908 = vld [vmem:[#allocation23 + $0x28] sm:$0xf]
    %v909 = vld [vmem:[#allocation23 + $0x2c] sm:$0xf]
    %v910 = vld [vmem:[#allocation23 + $0x30] sm:$0xf]
    %v911 = vld [vmem:[#allocation23 + $0x34] sm:$0xf]
    %v912 = vld [vmem:[#allocation23 + $0x38] sm:$0xf]
    %v913 = vld [vmem:[#allocation23 + $0x3c] sm:$0xf]
    %v914 = vunpack.c.l.bf16 %v898
    %v915 = vunpack.c.l.bf16 %v899
    %v916 = vunpack.c.l.bf16 %v900
    %v917 = vunpack.c.l.bf16 %v901
    %v918 = vunpack.c.l.bf16 %v902
    %v919 = vunpack.c.l.bf16 %v903
    %v920 = vunpack.c.l.bf16 %v904
    %v921 = vunpack.c.l.bf16 %v905
    %v922 = vunpack.c.l.bf16 %v906
    %v923 = vunpack.c.l.bf16 %v907
    %v924 = vunpack.c.l.bf16 %v908
    %v925 = vunpack.c.l.bf16 %v909
    %v926 = vunpack.c.l.bf16 %v910
    %v927 = vunpack.c.l.bf16 %v911
    %v928 = vunpack.c.l.bf16 %v912
    %v929 = vunpack.c.l.bf16 %v913
    %v930 = vld [vmem:[%s17] sm:$0xf]
    %v931 = vld [vmem:[%s17 + $0x4] sm:$0xf]
    %v932 = vld [vmem:[%s17 + $0x8] sm:$0xf]
    %v933 = vld [vmem:[%s17 + $0xc] sm:$0xf]
    %v934 = vld [vmem:[%s17 + $0x10] sm:$0xf]
    %v935 = vld [vmem:[%s17 + $0x14] sm:$0xf]
    %v936 = vld [vmem:[%s17 + $0x18] sm:$0xf]
    %v937 = vld [vmem:[%s17 + $0x1c] sm:$0xf]
    %v938 = vld [vmem:[%s17 + $0x20] sm:$0xf]
    %v939 = vld [vmem:[%s17 + $0x24] sm:$0xf]
    %v940 = vld [vmem:[%s17 + $0x28] sm:$0xf]
    %v941 = vld [vmem:[%s17 + $0x2c] sm:$0xf]
    %v942 = vld [vmem:[%s17 + $0x30] sm:$0xf]
    %v943 = vld [vmem:[%s17 + $0x34] sm:$0xf]
    %v944 = vld [vmem:[%s17 + $0x38] sm:$0xf]
    %v945 = vld [vmem:[%s17 + $0x3c] sm:$0xf]
    %v946 = vunpack.c.l.bf16 %v930
    %v947 = vunpack.c.l.bf16 %v931
    %v948 = vunpack.c.l.bf16 %v932
    %v949 = vunpack.c.l.bf16 %v933
    %v950 = vunpack.c.l.bf16 %v934
    %v951 = vunpack.c.l.bf16 %v935
    %v952 = vunpack.c.l.bf16 %v936
    %v953 = vunpack.c.l.bf16 %v937
    %v954 = vunpack.c.l.bf16 %v938
    %v955 = vunpack.c.l.bf16 %v939
    %v956 = vunpack.c.l.bf16 %v940
    %v957 = vunpack.c.l.bf16 %v941
    %v958 = vunpack.c.l.bf16 %v942
    %v959 = vunpack.c.l.bf16 %v943
    %v960 = vunpack.c.l.bf16 %v944
    %v961 = vunpack.c.l.bf16 %v945
    %v962 = vmul.f32 %v867, %v946
    %v963 = vmul.f32 %v869, %v947
    %v964 = vmul.f32 %v871, %v948
    %v965 = vmul.f32 %v873, %v949
    %v966 = vmul.f32 %v875, %v950
    %v967 = vmul.f32 %v877, %v951
    %v968 = vmul.f32 %v879, %v952
    %v969 = vmul.f32 %v881, %v953
    %v970 = vmul.f32 %v883, %v954
    %v971 = vmul.f32 %v885, %v955
    %v972 = vmul.f32 %v887, %v956
    %v973 = vmul.f32 %v889, %v957
    %v974 = vmul.f32 %v891, %v958
    %v975 = vmul.f32 %v893, %v959
    %v976 = vmul.f32 %v895, %v960
    %v977 = vmul.f32 %v897, %v961
    %v978 = vadd.f32 %v914, %v962
    %v979 = vadd.f32 %v915, %v963
    %v980 = vadd.f32 %v916, %v964
    %v981 = vadd.f32 %v917, %v965
    %v982 = vadd.f32 %v918, %v966
    %v983 = vadd.f32 %v919, %v967
    %v984 = vadd.f32 %v920, %v968
    %v985 = vadd.f32 %v921, %v969
    %v986 = vadd.f32 %v922, %v970
    %v987 = vadd.f32 %v923, %v971
    %v988 = vadd.f32 %v924, %v972
    %v989 = vadd.f32 %v925, %v973
    %v990 = vadd.f32 %v926, %v974
    %v991 = vadd.f32 %v927, %v975
    %v992 = vadd.f32 %v928, %v976
    %v993 = vadd.f32 %v929, %v977
    %v994 = vld [vmem:[#allocation28] sm:$0x1]
    %v995 = vunpack.c.l.bf16 %v994
    %v996 = vmul.f32 %v995, 0.5
    %v997 = vmul.f32 %v996, 1.442695
    %v998 = vpow.pop %v997
    %v999 = vld [vmem:[#allocation26] sm:$0x1]
    %v1000 = vunpack.c.l.bf16 %v999
    %v1001 = vld [vmem:[%s18] sm:$0x1]
    %v1002 = vunpack.c.l.bf16 %v1001
    %v1003 = vmul.f32 %v998, %v1002
    %v1004 = vadd.f32 %v1000, %v1003
    %v1005 = vpack.c.bf16 %v817, %v817
    %v1006 = vpack.c.bf16 %v979, %v978
    %v1007 = vpack.c.bf16 %v981, %v980
    %v1008 = vpack.c.bf16 %v983, %v982
    %v1009 = vpack.c.bf16 %v985, %v984
    %v1010 = vpack.c.bf16 %v987, %v986
    %v1011 = vpack.c.bf16 %v989, %v988
    %v1012 = vpack.c.bf16 %v991, %v990
    %v1013 = vpack.c.bf16 %v993, %v992
    %v1014 = vlaneseq
    %v1015 = vshrl.u32 %v1014, 7
    %v1016 = vsub.s32 0, %v1015
    %v1017 = vrot.slane %v1004, %v1016
    %1018 = vmatprep.subr.bf16.mxu0 0
    %1019 = vmatpush1.bf16.msra.mxu0 %v1006
    %1020 = vmatprep.subr.bf16.mxu0 0
    %1021 = vmatpush1.bf16.msra.mxu0 %v1007
    %1022 = vmatprep.subr.bf16.mxu0 0
    %1023 = vmatpush1.bf16.msra.mxu0 %v1008
    %1024 = vmatprep.subr.bf16.mxu0 0
    %1025 = vmatpush1.bf16.msra.mxu0 %v1009
    %1026 = vmatprep.subr.bf16.mxu0 0
    %1027 = vmatpush1.bf16.msra.mxu0 %v1010
    %1028 = vmatprep.subr.bf16.mxu0 0
    %1029 = vmatpush1.bf16.msra.mxu0 %v1011
    %1030 = vmatprep.subr.bf16.mxu0 0
    %1031 = vmatpush1.bf16.msra.mxu0 %v1012
    %1032 = vmatprep.subr.bf16.mxu0 0
    %1033 = vmatpush1.bf16.msra.mxu0 %v1013
    %1034 = vmatprep.subr.bf16.mxu0 0
    %1035 = vmatpush1.bf16.msra.mxu0 0
    %1036 = vmatprep.subr.bf16.mxu0 0
    %1037 = vmatpush1.bf16.msra.mxu0 0
    %1038 = vmatprep.subr.bf16.mxu0 0
    %1039 = vmatpush1.bf16.msra.mxu0 0
    %1040 = vmatprep.subr.bf16.mxu0 0
    %1041 = vmatpush1.bf16.msra.mxu0 0
    %1042 = vmatprep.subr.bf16.mxu0 0
    %1043 = vmatpush1.bf16.msra.mxu0 0
    %1044 = vmatprep.subr.bf16.mxu0 0
    %1045 = vmatpush1.bf16.msra.mxu0 0
    %1046 = vmatprep.subr.bf16.mxu0 0
    %1047 = vmatpush1.bf16.msra.mxu0 0
    %1048 = vmatprep.subr.bf16.mxu0 0
    %1049 = vmatpush1.bf16.msra.mxu0 0
    %1050 = vmatprep.mubr.bf16.mxu0 0
    %1051 = vmatmul.mubr.bf16.gmra.mrb[0].mxu0 %v1005
    %v1052 = vpop.f32.mrb[0].mxu0
    %v1053 = vadd.f32 %v1017, %v1052
    %v1054 = vpop.f32.mrb[0].mxu0
    %v1055 = vpop.f32.mrb[0].mxu0
    %v1056 = vpop.f32.mrb[0].mxu0
    %1057 = vdwg.mxu0
    %v1058 = vmax.f32 %v1053, 0.0
    %v1059 = vld [vmem:[#allocation31] sm:$0xf]
    %v1060 = vld [vmem:[#allocation31 + $0x4] sm:$0xf]
    %v1061 = vld [vmem:[#allocation31 + $0x8] sm:$0xf]
    %v1062 = vld [vmem:[#allocation31 + $0xc] sm:$0xf]
    %v1063 = vld [vmem:[#allocation31 + $0x10] sm:$0xf]
    %v1064 = vld [vmem:[#allocation31 + $0x14] sm:$0xf]
    %v1065 = vld [vmem:[#allocation31 + $0x18] sm:$0xf]
    %v1066 = vld [vmem:[#allocation31 + $0x1c] sm:$0xf]
    %v1067 = vld [vmem:[#allocation31 + $0x20] sm:$0xf]
    %v1068 = vld [vmem:[#allocation31 + $0x24] sm:$0xf]
    %v1069 = vld [vmem:[#allocation31 + $0x28] sm:$0xf]
    %v1070 = vld [vmem:[#allocation31 + $0x2c] sm:$0xf]
    %v1071 = vld [vmem:[#allocation31 + $0x30] sm:$0xf]
    %v1072 = vld [vmem:[#allocation31 + $0x34] sm:$0xf]
    %v1073 = vld [vmem:[#allocation31 + $0x38] sm:$0xf]
    %v1074 = vld [vmem:[#allocation31 + $0x3c] sm:$0xf]
    %v1075 = vunpack.c.l.bf16 %v1059
    %v1076 = vunpack.c.l.bf16 %v1060
    %v1077 = vunpack.c.l.bf16 %v1061
    %v1078 = vunpack.c.l.bf16 %v1062
    %v1079 = vunpack.c.l.bf16 %v1063
    %v1080 = vunpack.c.l.bf16 %v1064
    %v1081 = vunpack.c.l.bf16 %v1065
    %v1082 = vunpack.c.l.bf16 %v1066
    %v1083 = vunpack.c.l.bf16 %v1067
    %v1084 = vunpack.c.l.bf16 %v1068
    %v1085 = vunpack.c.l.bf16 %v1069
    %v1086 = vunpack.c.l.bf16 %v1070
    %v1087 = vunpack.c.l.bf16 %v1071
    %v1088 = vunpack.c.l.bf16 %v1072
    %v1089 = vunpack.c.l.bf16 %v1073
    %v1090 = vunpack.c.l.bf16 %v1074
    %v1091 = vmul.f32 %v1075, 0.5
    %v1092 = vmul.f32 %v1076, 0.5
    %v1093 = vmul.f32 %v1077, 0.5
    %v1094 = vmul.f32 %v1078, 0.5
    %v1095 = vmul.f32 %v1079, 0.5
    %v1096 = vmul.f32 %v1080, 0.5
    %v1097 = vmul.f32 %v1081, 0.5
    %v1098 = vmul.f32 %v1082, 0.5
    %v1099 = vmul.f32 %v1083, 0.5
    %v1100 = vmul.f32 %v1084, 0.5
    %v1101 = vmul.f32 %v1085, 0.5
    %v1102 = vmul.f32 %v1086, 0.5
    %v1103 = vmul.f32 %v1087, 0.5
    %v1104 = vmul.f32 %v1088, 0.5
    %v1105 = vmul.f32 %v1089, 0.5
    %v1106 = vmul.f32 %v1090, 0.5
    %v1107 = vmul.f32 %v1091, 1.442695
    %v1108 = vpow.pop %v1107
    %v1109 = vmul.f32 %v1092, 1.442695
    %v1110 = vpow.pop %v1109
    %v1111 = vmul.f32 %v1093, 1.442695
    %v1112 = vpow.pop %v1111
    %v1113 = vmul.f32 %v1094, 1.442695
    %v1114 = vpow.pop %v1113
    %v1115 = vmul.f32 %v1095, 1.442695
    %v1116 = vpow.pop %v1115
    %v1117 = vmul.f32 %v1096, 1.442695
    %v1118 = vpow.pop %v1117
    %v1119 = vmul.f32 %v1097, 1.442695
    %v1120 = vpow.pop %v1119
    %v1121 = vmul.f32 %v1098, 1.442695
    %v1122 = vpow.pop %v1121
    %v1123 = vmul.f32 %v1099, 1.442695
    %v1124 = vpow.pop %v1123
    %v1125 = vmul.f32 %v1100, 1.442695
    %v1126 = vpow.pop %v1125
    %v1127 = vmul.f32 %v1101, 1.442695
    %v1128 = vpow.pop %v1127
    %v1129 = vmul.f32 %v1102, 1.442695
    %v1130 = vpow.pop %v1129
    %v1131 = vmul.f32 %v1103, 1.442695
    %v1132 = vpow.pop %v1131
    %v1133 = vmul.f32 %v1104, 1.442695
    %v1134 = vpow.pop %v1133
    %v1135 = vmul.f32 %v1105, 1.442695
    %v1136 = vpow.pop %v1135
    %v1137 = vmul.f32 %v1106, 1.442695
    %v1138 = vpow.pop %v1137
    %v1139 = vld [vmem:[#allocation29] sm:$0xf]
    %v1140 = vld [vmem:[#allocation29 + $0x4] sm:$0xf]
    %v1141 = vld [vmem:[#allocation29 + $0x8] sm:$0xf]
    %v1142 = vld [vmem:[#allocation29 + $0xc] sm:$0xf]
    %v1143 = vld [vmem:[#allocation29 + $0x10] sm:$0xf]
    %v1144 = vld [vmem:[#allocation29 + $0x14] sm:$0xf]
    %v1145 = vld [vmem:[#allocation29 + $0x18] sm:$0xf]
    %v1146 = vld [vmem:[#allocation29 + $0x1c] sm:$0xf]
    %v1147 = vld [vmem:[#allocation29 + $0x20] sm:$0xf]
    %v1148 = vld [vmem:[#allocation29 + $0x24] sm:$0xf]
    %v1149 = vld [vmem:[#allocation29 + $0x28] sm:$0xf]
    %v1150 = vld [vmem:[#allocation29 + $0x2c] sm:$0xf]
    %v1151 = vld [vmem:[#allocation29 + $0x30] sm:$0xf]
    %v1152 = vld [vmem:[#allocation29 + $0x34] sm:$0xf]
    %v1153 = vld [vmem:[#allocation29 + $0x38] sm:$0xf]
    %v1154 = vld [vmem:[#allocation29 + $0x3c] sm:$0xf]
    %v1155 = vunpack.c.l.bf16 %v1139
    %v1156 = vunpack.c.l.bf16 %v1140
    %v1157 = vunpack.c.l.bf16 %v1141
    %v1158 = vunpack.c.l.bf16 %v1142
    %v1159 = vunpack.c.l.bf16 %v1143
    %v1160 = vunpack.c.l.bf16 %v1144
    %v1161 = vunpack.c.l.bf16 %v1145
    %v1162 = vunpack.c.l.bf16 %v1146
    %v1163 = vunpack.c.l.bf16 %v1147
    %v1164 = vunpack.c.l.bf16 %v1148
    %v1165 = vunpack.c.l.bf16 %v1149
    %v1166 = vunpack.c.l.bf16 %v1150
    %v1167 = vunpack.c.l.bf16 %v1151
    %v1168 = vunpack.c.l.bf16 %v1152
    %v1169 = vunpack.c.l.bf16 %v1153
    %v1170 = vunpack.c.l.bf16 %v1154
    %v1171 = vld [vmem:[#allocation32] sm:$0xf]
    %v1172 = vld [vmem:[#allocation32 + $0x4] sm:$0xf]
    %v1173 = vld [vmem:[#allocation32 + $0x8] sm:$0xf]
    %v1174 = vld [vmem:[#allocation32 + $0xc] sm:$0xf]
    %v1175 = vld [vmem:[#allocation32 + $0x10] sm:$0xf]
    %v1176 = vld [vmem:[#allocation32 + $0x14] sm:$0xf]
    %v1177 = vld [vmem:[#allocation32 + $0x18] sm:$0xf]
    %v1178 = vld [vmem:[#allocation32 + $0x1c] sm:$0xf]
    %v1179 = vld [vmem:[#allocation32 + $0x20] sm:$0xf]
    %v1180 = vld [vmem:[#allocation32 + $0x24] sm:$0xf]
    %v1181 = vld [vmem:[#allocation32 + $0x28] sm:$0xf]
    %v1182 = vld [vmem:[#allocation32 + $0x2c] sm:$0xf]
    %v1183 = vld [vmem:[#allocation32 + $0x30] sm:$0xf]
    %v1184 = vld [vmem:[#allocation32 + $0x34] sm:$0xf]
    %v1185 = vld [vmem:[#allocation32 + $0x38] sm:$0xf]
    %v1186 = vld [vmem:[#allocation32 + $0x3c] sm:$0xf]
    %v1187 = vunpack.c.l.bf16 %v1171
    %v1188 = vunpack.c.l.bf16 %v1172
    %v1189 = vunpack.c.l.bf16 %v1173
    %v1190 = vunpack.c.l.bf16 %v1174
    %v1191 = vunpack.c.l.bf16 %v1175
    %v1192 = vunpack.c.l.bf16 %v1176
    %v1193 = vunpack.c.l.bf16 %v1177
    %v1194 = vunpack.c.l.bf16 %v1178
    %v1195 = vunpack.c.l.bf16 %v1179
    %v1196 = vunpack.c.l.bf16 %v1180
    %v1197 = vunpack.c.l.bf16 %v1181
    %v1198 = vunpack.c.l.bf16 %v1182
    %v1199 = vunpack.c.l.bf16 %v1183
    %v1200 = vunpack.c.l.bf16 %v1184
    %v1201 = vunpack.c.l.bf16 %v1185
    %v1202 = vunpack.c.l.bf16 %v1186
    %v1203 = vmul.f32 %v1108, %v1187
    %v1204 = vmul.f32 %v1110, %v1188
    %v1205 = vmul.f32 %v1112, %v1189
    %v1206 = vmul.f32 %v1114, %v1190
    %v1207 = vmul.f32 %v1116, %v1191
    %v1208 = vmul.f32 %v1118, %v1192
    %v1209 = vmul.f32 %v1120, %v1193
    %v1210 = vmul.f32 %v1122, %v1194
    %v1211 = vmul.f32 %v1124, %v1195
    %v1212 = vmul.f32 %v1126, %v1196
    %v1213 = vmul.f32 %v1128, %v1197
    %v1214 = vmul.f32 %v1130, %v1198
    %v1215 = vmul.f32 %v1132, %v1199
    %v1216 = vmul.f32 %v1134, %v1200
    %v1217 = vmul.f32 %v1136, %v1201
    %v1218 = vmul.f32 %v1138, %v1202
    %v1219 = vadd.f32 %v1155, %v1203
    %v1220 = vadd.f32 %v1156, %v1204
    %v1221 = vadd.f32 %v1157, %v1205
    %v1222 = vadd.f32 %v1158, %v1206
    %v1223 = vadd.f32 %v1159, %v1207
    %v1224 = vadd.f32 %v1160, %v1208
    %v1225 = vadd.f32 %v1161, %v1209
    %v1226 = vadd.f32 %v1162, %v1210
    %v1227 = vadd.f32 %v1163, %v1211
    %v1228 = vadd.f32 %v1164, %v1212
    %v1229 = vadd.f32 %v1165, %v1213
    %v1230 = vadd.f32 %v1166, %v1214
    %v1231 = vadd.f32 %v1167, %v1215
    %v1232 = vadd.f32 %v1168, %v1216
    %v1233 = vadd.f32 %v1169, %v1217
    %v1234 = vadd.f32 %v1170, %v1218
    %v1235 = vld [vmem:[%s22] sm:$0x1]
    %v1236 = vunpack.c.l.bf16 %v1235
    %v1237 = vmul.f32 %v1236, 0.5
    %v1238 = vmul.f32 %v1237, 1.442695
    %v1239 = vpow.pop %v1238
    %v1240 = vld [vmem:[%s21] sm:$0x1]
    %v1241 = vunpack.c.l.bf16 %v1240
    %v1242 = vld [vmem:[%s24] sm:$0x1]
    %v1243 = vunpack.c.l.bf16 %v1242
    %v1244 = vmul.f32 %v1239, %v1243
    %v1245 = vadd.f32 %v1241, %v1244
    %v1246 = vpack.c.bf16 %v1058, %v1058
    %v1247 = vpack.c.bf16 %v1220, %v1219
    %v1248 = vpack.c.bf16 %v1222, %v1221
    %v1249 = vpack.c.bf16 %v1224, %v1223
    %v1250 = vpack.c.bf16 %v1226, %v1225
    %v1251 = vpack.c.bf16 %v1228, %v1227
    %v1252 = vpack.c.bf16 %v1230, %v1229
    %v1253 = vpack.c.bf16 %v1232, %v1231
    %v1254 = vpack.c.bf16 %v1234, %v1233
    %v1255 = vlaneseq
    %v1256 = vshrl.u32 %v1255, 7
    %v1257 = vsub.s32 0, %v1256
    %v1258 = vrot.slane %v1245, %v1257
    %1259 = vmatprep.subr.bf16.mxu0 0
    %1260 = vmatpush1.bf16.msra.mxu0 %v1247
    %1261 = vmatprep.subr.bf16.mxu0 0
    %1262 = vmatpush1.bf16.msra.mxu0 %v1248
    %1263 = vmatprep.subr.bf16.mxu0 0
    %1264 = vmatpush1.bf16.msra.mxu0 %v1249
    %1265 = vmatprep.subr.bf16.mxu0 0
    %1266 = vmatpush1.bf16.msra.mxu0 %v1250
    %1267 = vmatprep.subr.bf16.mxu0 0
    %1268 = vmatpush1.bf16.msra.mxu0 %v1251
    %1269 = vmatprep.subr.bf16.mxu0 0
    %1270 = vmatpush1.bf16.msra.mxu0 %v1252
    %1271 = vmatprep.subr.bf16.mxu0 0
    %1272 = vmatpush1.bf16.msra.mxu0 %v1253
    %1273 = vmatprep.subr.bf16.mxu0 0
    %1274 = vmatpush1.bf16.msra.mxu0 %v1254
    %1275 = vmatprep.subr.bf16.mxu0 0
    %1276 = vmatpush1.bf16.msra.mxu0 0
    %1277 = vmatprep.subr.bf16.mxu0 0
    %1278 = vmatpush1.bf16.msra.mxu0 0
    %1279 = vmatprep.subr.bf16.mxu0 0
    %1280 = vmatpush1.bf16.msra.mxu0 0
    %1281 = vmatprep.subr.bf16.mxu0 0
    %1282 = vmatpush1.bf16.msra.mxu0 0
    %1283 = vmatprep.subr.bf16.mxu0 0
    %1284 = vmatpush1.bf16.msra.mxu0 0
    %1285 = vmatprep.subr.bf16.mxu0 0
    %1286 = vmatpush1.bf16.msra.mxu0 0
    %1287 = vmatprep.subr.bf16.mxu0 0
    %1288 = vmatpush1.bf16.msra.mxu0 0
    %1289 = vmatprep.subr.bf16.mxu0 0
    %1290 = vmatpush1.bf16.msra.mxu0 0
    %1291 = vmatprep.mubr.bf16.mxu0 0
    %1292 = vmatmul.mubr.bf16.gmra.mrb[0].mxu0 %v1246
    %v1293 = vpop.f32.mrb[0].mxu0
    %v1294 = vadd.f32 %v1258, %v1293
    %v1295 = vpop.f32.mrb[0].mxu0
    %v1296 = vpop.f32.mrb[0].mxu0
    %v1297 = vpop.f32.mrb[0].mxu0
    %1298 = vdwg.mxu0
    %1299 = vst [vmem:[#allocation34] sm:$0xff] %v1294
    // Predicated region
    $region182: #{tpu_custom_call.1} parent=1 // pred_check
      _
    $region183: #{tpu_custom_call.1} parent=1 // pred_check_branch
      %1301 = sbr.rel (0) target = $region185
    $region184: #{tpu_custom_call.1} parent=1 // pred_region
      %s1303 = ssub.s32 128, 128
      %1304 = vsyncadd [#allocation4], %s1303
      %s1306 = sshll.u32 [#allocation34], 4
      %s1307 = int_to_ptr.vmem [resolvable:$true] %s1306
      %1309 = dma.vmem_to_hbm [thread:$0]  %s1307, 128, %s25, [#allocation4]
    $region185: #{tpu_custom_call.1} parent=1 // pred_fallthru
      _
    // Predicated region
    $region186: #{tpu_custom_call.1} parent=1 // pred_check
      _
    $region187: #{tpu_custom_call.1} parent=1 // pred_check_branch
      %1311 = sbr.rel (0) target = $region189
    $region188: #{tpu_custom_call.1} parent=1 // pred_region
      %1312 = dma.done [#allocation4], 128
    $region189: #{tpu_custom_call.1} parent=1 // pred_fallthru
      _
    %1313 = vsyncpa [#allocation3], 1
    %1314 = vsyncpa [#allocation6], 1
    %1315 = vsyncpa [#allocation9], 1
    %1316 = vsyncpa [#allocation12], 1
    %1317 = vsyncpa [#allocation15], 1
    %1318 = vsyncpa [#allocation18], 1
    %1319 = vsyncpa [#allocation21], 1
    %1320 = vsyncpa [#allocation24], 1
    %1321 = vsyncpa [#allocation27], 1
    %1322 = vsyncpa [#allocation30], 1
    %1323 = vsyncpa [#allocation33], 1
    %1324 = vsyncpa [#allocation4], 1

</llo_original>
